<compile_context>
chip_gen: v7x
topology: tpu7x:2x2x1
jax: 0.10.0
libtpu: 0.0.40
codegen_flags: <defaults>
</compile_context>

<pallas_src>
import functools
import math

import jax
import jax.numpy as jnp
from jax.experimental import pallas as pl
from jax.experimental.pallas import tpu as pltpu

EPS = 1e-5
LRELU_SLOPE = 0.2


# ---------------------------------------------------------------------------
# In-kernel helpers
# ---------------------------------------------------------------------------
def _apply_act(y, act):
    if act is None or act == "none":
        return y
    if act == "relu":
        return jnp.maximum(y, 0.0)
    if act in ("lrelu", "leakyrelu", "leaky_relu"):
        return jnp.where(y >= 0, y, LRELU_SLOPE * y)
    if act == "tanh":
        return jnp.tanh(y)
    raise NotImplementedError(f"non-linearity '{act}' not supported")


def _aug_gram_bf16(a_bf):
    """[a;1] @ [a;1]^T  in bf16 on the MXU (f32 accumulation).

    Top-left [C,C] block is sum over pixels of a a^T, last column (rows :C) is
    sum over pixels of a, corner is the pixel count.  bf16 operands avoid the
    multi-pass f32 MXU lowering and match what the next layer actually reads.
    """
    ones = jnp.ones((1, a_bf.shape[1]), jnp.bfloat16)
    aug = jnp.concatenate([a_bf, ones], axis=0)          # [C+1, TM]
    return jax.lax.dot_general(
        aug, aug, dimension_numbers=(((1,), (1,)), ((), ())),
        preferred_element_type=jnp.float32)              # [C+1, C+1] f32


# ---------------------------------------------------------------------------
# Fused layer kernels: 1x1 conv (MXU) + folded BN scale/shift + activation
# (+ optional per-tile stats for the NEXT layer's BN, or fused residual add)
# ---------------------------------------------------------------------------
def _conv_bn_act_kernel(h_ref, w_ref, scale_ref, shift_ref, o_ref, *, act):
    h = h_ref[0]                                    # [Cin, TM]   (bf16)
    w = w_ref[...]                                  # [Cout, Cin] (bf16)
    y = jnp.dot(w, h, preferred_element_type=jnp.float32)   # MXU, f32 acc
    y = y * scale_ref[...] + shift_ref[...]         # BN (+ conv bias) as scale/shift
    a = _apply_act(y, act)                          # f32 VPU / EUP
    o_ref[0] = a.astype(o_ref.dtype)                # lane-dense store (last dim = TM)


def _conv_bn_act_res_kernel(h_ref, w_ref, scale_ref, shift_ref, r_ref, o_ref, *, act):
    h = h_ref[0]
    w = w_ref[...]
    y = jnp.dot(w, h, preferred_element_type=jnp.float32)
    y = y * scale_ref[...] + shift_ref[...]
    a = _apply_act(y, act)
    a = a + r_ref[0].astype(jnp.float32)            # fused residual add
    o_ref[0] = a.astype(o_ref.dtype)


def _conv_bn_act_stats_kernel(h_ref, w_ref, scale_ref, shift_ref, o_ref, g_ref, *, act):
    h = h_ref[0]
    w = w_ref[...]
    y = jnp.dot(w, h, preferred_element_type=jnp.float32)
    y = y * scale_ref[...] + shift_ref[...]
    a = _apply_act(y, act)
    a_bf = a.astype(jnp.bfloat16)                   # cast once; stored AND used for Gram
    o_ref[0] = a_bf
    # Single combined stats output (sums + Gram via augmented-ones row).
    # TODO(synk): last dim is Cout+1 (<128 for narrow nets) -> masked stores, but the
    #             stats traffic is <1% of the activation traffic.
    g_ref[0, 0] = _aug_gram_bf16(a_bf)


def _cast_stats_kernel(x_ref, o_ref, g_ref):
    """Fused input pre-pass: f32 x -> bf16 copy + per-tile stats of the bf16 copy."""
    a_bf = x_ref[0].astype(jnp.bfloat16)
    o_ref[0] = a_bf
    g_ref[0, 0] = _aug_gram_bf16(a_bf)


# ---------------------------------------------------------------------------
# pallas_call wrappers
# ---------------------------------------------------------------------------
_VMEM_LIMIT = 32 * 1024 * 1024  # safe on v5e/v6e (128 MiB) and v7x (64 MiB); our
                                # double-buffered blocks are only a few MiB at TM=8192.


def _cast_stats_pass(x3, *, tm):
    n, c0, hw = x3.shape
    assert hw % tm == 0, (hw, tm)
    t = hw // tm
    c1 = c0 + 1
    return pl.pallas_call(
        _cast_stats_kernel,
        out_shape=(jax.ShapeDtypeStruct((n, c0, hw), jnp.bfloat16),
                   jax.ShapeDtypeStruct((n, t, c1, c1), jnp.float32)),
        grid=(n, t),
        in_specs=[pl.BlockSpec((1, c0, tm), lambda b, s: (b, 0, s))],
        out_specs=(pl.BlockSpec((1, c0, tm), lambda b, s: (b, 0, s)),
                   pl.BlockSpec((1, 1, c1, c1), lambda b, s: (b, s, 0, 0))),
        compiler_params=pltpu.CompilerParams(
            dimension_semantics=("parallel", "parallel"),
            vmem_limit_bytes=_VMEM_LIMIT),
        cost_estimate=pl.CostEstimate(
            flops=int(2 * n * hw * c1 * c1),
            transcendentals=0,
            bytes_accessed=int(x3.size * x3.dtype.itemsize
                               + n * c0 * hw * 2 + n * t * c1 * c1 * 4)),
    )(x3)


def _fused_conv1x1_layer(h3, w_bf, scale, shift, *, act, emit_stats, out_dtype,
                         tm, residual=None):
    """One block: h3 [N, Cin, HW] -> [N, Cout, HW] (+ optional stats / residual)."""
    n, c_in, hw = h3.shape
    c_out = w_bf.shape[0]
    assert hw % tm == 0, (hw, tm)
    assert not (emit_stats and residual is not None)
    t = hw // tm
    grid = (n, t)

    in_specs = [
        pl.BlockSpec((1, c_in, tm), lambda b, s: (b, 0, s)),
        pl.BlockSpec((c_out, c_in), lambda b, s: (0, 0)),
        pl.BlockSpec((c_out, 1), lambda b, s: (0, 0)),
        pl.BlockSpec((c_out, 1), lambda b, s: (0, 0)),
    ]
    operands = [h3, w_bf, scale, shift]
    if residual is not None:
        in_specs.append(pl.BlockSpec((1, c_out, tm), lambda b, s: (b, 0, s)))
        operands.append(residual)

    m_total = n * hw
    flops = 2 * m_total * c_in * c_out
    transc = m_total * c_out if act == "tanh" else 0
    bytes_accessed = (h3.size * h3.dtype.itemsize
                      + w_bf.size * 2 + 2 * c_out * 4
                      + n * c_out * hw * jnp.dtype(out_dtype).itemsize)
    if residual is not None:
        bytes_accessed += residual.size * residual.dtype.itemsize

    if emit_stats:
        c1 = c_out + 1
        flops += 2 * m_total * c1 * c1
        bytes_accessed += n * t * c1 * c1 * 4
        out_shape = (
            jax.ShapeDtypeStruct((n, c_out, hw), out_dtype),
            jax.ShapeDtypeStruct((n, t, c1, c1), jnp.float32),
        )
        out_specs = (
            pl.BlockSpec((1, c_out, tm), lambda b, s: (b, 0, s)),
            pl.BlockSpec((1, 1, c1, c1), lambda b, s: (b, s, 0, 0)),
        )
        kernel = functools.partial(_conv_bn_act_stats_kernel, act=act)
    else:
        out_shape = jax.ShapeDtypeStruct((n, c_out, hw), out_dtype)
        out_specs = pl.BlockSpec((1, c_out, tm), lambda b, s: (b, 0, s))
        if residual is not None:
            kernel = functools.partial(_conv_bn_act_res_kernel, act=act)
        else:
            kernel = functools.partial(_conv_bn_act_kernel, act=act)

    return pl.pallas_call(
        kernel,
        out_shape=out_shape,
        grid=grid,
        in_specs=in_specs,
        out_specs=out_specs,
        compiler_params=pltpu.CompilerParams(
            dimension_semantics=("parallel", "parallel"),
            vmem_limit_bytes=_VMEM_LIMIT,
        ),
        cost_estimate=pl.CostEstimate(
            flops=int(flops),
            transcendentals=int(transc),
            bytes_accessed=int(bytes_accessed),
        ),
    )(*operands)


# ---------------------------------------------------------------------------
# Glue
# ---------------------------------------------------------------------------
def _pick_tile(hw, n, max_c):
    """Largest lane-aligned spatial tile within ~2 MiB in+out block budget.

    Memory-bound kernel: measured data says tiles >=512 reach ~85% of HBM roofline
    vs ~29% at 128, and big tiles amortize the ~0.35 us/grid-step overhead.  Keep
    n*t >= 2 so both v7x TensorCores get work under ("parallel","parallel").
    """
    budget = (2 * 1024 * 1024) // max(4 * max_c, 1)     # tm * 2*max_c * 2B ~= 2 MiB
    cap = max(128, min(8192, budget))
    candidates = (8192, 4096, 2048, 1024, 512, 256, 128)
    best = None
    for tm in candidates:
        if tm <= cap and hw % tm == 0:
            best = tm
            break
    if best is None:
        # TODO(synk): ragged H*W (not a multiple of 128) falls back to a single spatial
        #             block; proper tiling would need in-kernel masking so padded
        #             columns don't pollute the batch-norm statistics.
        return hw
    if n * (hw // best) < 2:
        for tm in candidates:
            if tm < best and hw % tm == 0 and n * (hw // tm) >= 2:
                return tm
    return best


def _stats_from_gram(g, c):
    """Reduce per-tile augmented Grams -> (sum(h) [c], sum(h h^T) [c,c])."""
    gsum = jnp.sum(g, axis=(0, 1))                      # [c+1, c+1]
    return gsum[:c, c], gsum[:c, :c]


def netg_mlp_v1_forward(x, params, y=None, *, non_linearity="relu", bn=True,
                        end_activation="tanh", tm=None):
    n, c0, h, w = x.shape
    hw = h * w
    m_total = n * hw
    blocks = params["blocks"]
    n_blocks = len(blocks)
    max_c = max([c0] + [int(blk["w"].shape[0]) for blk in blocks])
    if tm is None:
        tm = _pick_tile(hw, n, max_c)

    x3 = x.reshape(n, c0, hw)

    stat_s = stat_p = None
    if bn and n_blocks > 1:
        # Fused pre-pass: 1 read of x -> bf16 h3 + stats of the bf16 tensor the
        # first layer actually consumes.
        h3, g0 = _cast_stats_pass(x3, tm=tm)
        stat_s, stat_p = _stats_from_gram(g0, c0)
    else:
        h3 = x3.astype(jnp.bfloat16)

    residual_fused = False
    for i, blk in enumerate(blocks):
        is_last = i == n_blocks - 1
        has_bn = bn and not is_last
        w_f32 = blk["w"].astype(jnp.float32)              # [Cout, Cin]
        b_f32 = blk["b"].astype(jnp.float32)              # [Cout]
        c_out = w_f32.shape[0]
        w_bf = w_f32.astype(jnp.bfloat16)
        wq = w_bf.astype(jnp.float32)                     # weights the kernel uses

        if has_bn:
            # BN stats of y = W h + b derived from mean/covariance of the bf16 h
            # (exact training-mode biased-variance BN, up to FP associativity).
            # TODO(synk): cov = E[hh^T] - mu mu^T can lose precision for very large
            #             m_total / large-mean activations; a centered two-pass
            #             formulation would be more robust.
            mu = stat_s / m_total
            cov = stat_p / m_total - jnp.outer(mu, mu)
            mean_y = wq @ mu + b_f32
            var_y = jnp.maximum(jnp.einsum("oc,cd,od->o", wq, cov, wq), 0.0)
            inv = jax.lax.rsqrt(var_y + EPS)
            gamma = blk.get("gamma", jnp.ones((c_out,), jnp.float32))
            beta = blk.get("beta", jnp.zeros((c_out,), jnp.float32))
            scale = gamma * inv
            shift = beta + (b_f32 - mean_y) * scale       # conv bias folded in
        else:
            scale = jnp.ones((c_out,), jnp.float32)
            shift = b_f32

        if is_last:
            # Module spec: nn.ReLU() if end_activation == 'relu' else nn.Tanh();
            # the last conv has no BN / block activation, so fuse it here.
            act = "relu" if end_activation == "relu" else "tanh"
        else:
            act = non_linearity

        emit_stats = bn and (i < n_blocks - 2)            # does the next layer have BN?
        out_dtype = jnp.float32 if is_last else jnp.bfloat16

        residual = None
        if is_last and y is not None and tuple(y.shape) == (n, c_out, h, w):
            residual = y.reshape(n, c_out, hw)            # fused into the last kernel
            residual_fused = True

        res = _fused_conv1x1_layer(
            h3, w_bf, scale.reshape(-1, 1), shift.reshape(-1, 1),
            act=act, emit_stats=emit_stats, out_dtype=out_dtype,
            tm=tm, residual=residual)

        if emit_stats:
            h3, g = res
            stat_s, stat_p = _stats_from_gram(g, c_out)
        else:
            h3 = res

    out = h3.reshape(n, h3.shape[1], h, w)
    if y is not None and not residual_fused:
        out = out + y.astype(out.dtype)                   # fallback (broadcast shapes)
    return out


# ---------------------------------------------------------------------------
# Parameter init (mirrors PyTorch Conv2d default init; fresh BN: gamma=1, beta=0)
# ---------------------------------------------------------------------------
def init_params(key, param):
    c = param["c_in"]
    widths = list(param["n_features"]) + [param["c_out"]]
    keys = jax.random.split(key, 2 * len(widths))
    blocks = []
    for i, c_out in enumerate(widths):
        kw, kb = keys[2 * i], keys[2 * i + 1]
        bound = 1.0 / math.sqrt(c)                        # fan_in = c * 1 * 1
        w = jax.random.uniform(kw, (c_out, c), jnp.float32, -bound, bound)
        b = jax.random.uniform(kb, (c_out,), jnp.float32, -bound, bound)
        blk = {"w": w, "b": b}
        if param.get("bn") and i < len(widths) - 1:
            blk["gamma"] = jnp.ones((c_out,), jnp.float32)
            blk["beta"] = jnp.zeros((c_out,), jnp.float32)
        blocks.append(blk)
        c = c_out
    return {"blocks": blocks}


# ---------------------------------------------------------------------------
# Pure-JAX reference (f32, NCHW) for a correctness check
# ---------------------------------------------------------------------------
def _reference_forward(x, params, y=None, *, non_linearity="relu", bn=True,
                       end_activation="tanh"):
    h = x.astype(jnp.float32)
    blocks = params["blocks"]
    n_blocks = len(blocks)
    for i, blk in enumerate(blocks):
        is_last = i == n_blocks - 1
        h = jnp.einsum("oc,nchw->nohw", blk["w"], h) + blk["b"][None, :, None, None]
        if bn and not is_last:
            mu = jnp.mean(h, axis=(0, 2, 3), keepdims=True)
            var = jnp.mean((h - mu) ** 2, axis=(0, 2, 3), keepdims=True)
            h = (h - mu) * jax.lax.rsqrt(var + EPS)
            h = (h * blk["gamma"][None, :, None, None]
                 + blk["beta"][None, :, None, None])
            h = _apply_act(h, non_linearity)
    h = _apply_act(h, "relu" if end_activation == "relu" else "tanh")
    if y is not None:
        h = h + y
    return h


if __name__ == "__main__":
    key = jax.random.PRNGKey(0)
    k_x, k_y, k_p = jax.random.split(key, 3)

    param = {"n_features": [32, 64, 32], "c_in": 4, "c_out": 3,
             "non_linearity": "relu", "bn": True}
    N, H, W = 2, 16, 16
    x = jax.random.normal(k_x, (N, param["c_in"], H, W), jnp.float32)
    yv = jax.random.normal(k_y, (N, param["c_out"], H, W), jnp.float32)
    params = init_params(k_p, param)

    fwd = jax.jit(functools.partial(
        netg_mlp_v1_forward,
        non_linearity=param["non_linearity"],
        bn=bool(param["bn"]),
        end_activation="tanh"))

    # No residual
    out = jax.block_until_ready(fwd(x, params))
    assert out.shape == (N, param["c_out"], H, W), out.shape
    assert bool(jnp.all(jnp.isfinite(out)))
    assert bool(jnp.all(jnp.abs(out) <= 1.0 + 1e-5))      # tanh range

    ref = _reference_forward(x, params, non_linearity=param["non_linearity"],
                             bn=bool(param["bn"]), end_activation="tanh")
    # bf16 MXU operands vs f32 reference -> loose tolerance
    assert bool(jnp.allclose(out, ref, atol=0.15, rtol=0.0)), \
        float(jnp.max(jnp.abs(out - ref)))

    # Fused residual path
    out_y = jax.block_until_ready(fwd(x, params, yv))
    ref_y = _reference_forward(x, params, yv, non_linearity=param["non_linearity"],
                               bn=bool(param["bn"]), end_activation="tanh")
    assert out_y.shape == (N, param["c_out"], H, W), out_y.shape
    assert bool(jnp.all(jnp.isfinite(out_y)))
    assert bool(jnp.allclose(out_y, ref_y, atol=0.15, rtol=0.0)), \
        float(jnp.max(jnp.abs(out_y - ref_y)))

    print("KERNEL_OK")
</pallas_src>

<mosaic_0001>
module attributes {stable_mosaic.version = 11 : i64} {
  func.func @_cast_stats_kernel(%arg0: i32, %arg1: i32, %arg2: memref<1x4x256xf32, #tpu.memory_space<vmem>>, %arg3: memref<1x4x256xbf16, #tpu.memory_space<vmem>>, %arg4: memref<1x1x5x5xf32, #tpu.memory_space<vmem>>) attributes {dimension_semantics = [#tpu.dimension_semantics<parallel>, #tpu.dimension_semantics<parallel>], iteration_bounds = array<i64: 2, 1>, scalar_prefetch = 0 : i64, scratch_operands = 0 : i64, tpu.core_type = #tpu.core_type<tc>, window_params = [{transform_indices = @transform_0, window_bounds = array<i64: 1, 4, 256>}, {transform_indices = @transform_1, window_bounds = array<i64: 1, 4, 256>}, {transform_indices = @transform_2, window_bounds = array<i64: 1, 1, 5, 5>}]} {
    %c0 = arith.constant 0 : index
    %c0_0 = arith.constant 0 : index
    %c0_1 = arith.constant 0 : index
    %0 = vector.load %arg2[%c0, %c0_0, %c0_1] : memref<1x4x256xf32, #tpu.memory_space<vmem>>, vector<1x4x256xf32>
    %1 = vector.shape_cast %0 : vector<1x4x256xf32> to vector<4x256xf32>
    %2 = arith.truncf %1 : vector<4x256xf32> to vector<4x256xbf16>
    %c0_2 = arith.constant 0 : index
    %c0_3 = arith.constant 0 : index
    %c0_4 = arith.constant 0 : index
    %3 = vector.load %arg3[%c0_2, %c0_3, %c0_4] : memref<1x4x256xbf16, #tpu.memory_space<vmem>>, vector<1x4x256xbf16>
    %4 = vector.shape_cast %3 : vector<1x4x256xbf16> to vector<4x256xbf16>
    %5 = vector.shape_cast %2 : vector<4x256xbf16> to vector<1x4x256xbf16>
    tpu.vector_store %arg3[%c0_2, %c0_3, %c0_4], %5 {strides = array<i32>} : memref<1x4x256xbf16, #tpu.memory_space<vmem>>, vector<1x4x256xbf16>,
    %cst = arith.constant 1.000000e+00 : bf16
    %6 = vector.broadcast %cst : bf16 to vector<1x256xbf16>
    %7 = tpu.concatenate %2, %6 in 0 : vector<4x256xbf16>, vector<1x256xbf16> -> vector<5x256xbf16>
    %cst_5 = arith.constant dense<0.000000e+00> : vector<5x5xf32>
    %8 = tpu.matmul %7, %7, %cst_5 {dimension_numbers = #tpu.dot_dimension_numbers<[1], [1], [0], [0], [0, 0, 1, 0], [], []>} : vector<5x256xbf16>, vector<5x256xbf16>, vector<5x5xf32> -> vector<5x5xf32>
    %c0_6 = arith.constant 0 : index
    %c0_7 = arith.constant 0 : index
    %c0_8 = arith.constant 0 : index
    %c0_9 = arith.constant 0 : index
    %9 = vector.load %arg4[%c0_6, %c0_7, %c0_8, %c0_9] : memref<1x1x5x5xf32, #tpu.memory_space<vmem>>, vector<1x1x5x5xf32>
    %10 = vector.shape_cast %9 : vector<1x1x5x5xf32> to vector<5x5xf32>
    %11 = vector.shape_cast %8 : vector<5x5xf32> to vector<1x1x5x5xf32>
    tpu.vector_store %arg4[%c0_6, %c0_7, %c0_8, %c0_9], %11 {strides = array<i32>} : memref<1x1x5x5xf32, #tpu.memory_space<vmem>>, vector<1x1x5x5xf32>,
    return
  }
  func.func @transform_0(%arg0: i32, %arg1: i32) -> (i32, i32, i32) {
    %c0_i32 = arith.constant 0 : i32
    %c0_i32_0 = arith.constant 0 : i32
    return %arg0, %c0_i32, %arg1 : i32, i32, i32
  }
  func.func @transform_1(%arg0: i32, %arg1: i32) -> (i32, i32, i32) {
    %c0_i32 = arith.constant 0 : i32
    %c0_i32_0 = arith.constant 0 : i32
    return %arg0, %c0_i32, %arg1 : i32, i32, i32
  }
  func.func @transform_2(%arg0: i32, %arg1: i32) -> (i32, i32, i32, i32) {
    %c0_i32 = arith.constant 0 : i32
    %c0_i32_0 = arith.constant 0 : i32
    %c0_i32_1 = arith.constant 0 : i32
    return %arg0, %arg1, %c0_i32, %c0_i32_0 : i32, i32, i32, i32
  }
}

module attributes {stable_mosaic.version = 11 : i64} {
  func.func @_conv_bn_act_stats_kernel(%arg0: i32, %arg1: i32, %arg2: memref<1x4x256xbf16, #tpu.memory_space<vmem>>, %arg3: memref<32x4xbf16, #tpu.memory_space<vmem>>, %arg4: memref<32x1xf32, #tpu.memory_space<vmem>>, %arg5: memref<32x1xf32, #tpu.memory_space<vmem>>, %arg6: memref<1x32x256xbf16, #tpu.memory_space<vmem>>, %arg7: memref<1x1x33x33xf32, #tpu.memory_space<vmem>>) attributes {dimension_semantics = [#tpu.dimension_semantics<parallel>, #tpu.dimension_semantics<parallel>], iteration_bounds = array<i64: 2, 1>, scalar_prefetch = 0 : i64, scratch_operands = 0 : i64, tpu.core_type = #tpu.core_type<tc>, window_params = [{transform_indices = @transform_0, window_bounds = array<i64: 1, 4, 256>}, {pipeline_mode = #tpu.pipeline_mode<synchronous>, transform_indices = @transform_1, window_bounds = array<i64: 32, 4>}, {pipeline_mode = #tpu.pipeline_mode<synchronous>, transform_indices = @transform_2, window_bounds = array<i64: 32, 1>}, {pipeline_mode = #tpu.pipeline_mode<synchronous>, transform_indices = @transform_3, window_bounds = array<i64: 32, 1>}, {transform_indices = @transform_4, window_bounds = array<i64: 1, 32, 256>}, {transform_indices = @transform_5, window_bounds = array<i64: 1, 1, 33, 33>}]} {
    %c0 = arith.constant 0 : index
    %c0_0 = arith.constant 0 : index
    %c0_1 = arith.constant 0 : index
    %0 = vector.load %arg2[%c0, %c0_0, %c0_1] : memref<1x4x256xbf16, #tpu.memory_space<vmem>>, vector<1x4x256xbf16>
    %1 = vector.shape_cast %0 : vector<1x4x256xbf16> to vector<4x256xbf16>
    %c0_2 = arith.constant 0 : index
    %c0_3 = arith.constant 0 : index
    %2 = vector.load %arg3[%c0_2, %c0_3] : memref<32x4xbf16, #tpu.memory_space<vmem>>, vector<32x4xbf16>
    %cst = arith.constant dense<0.000000e+00> : vector<32x256xf32>
    %3 = tpu.matmul %2, %1, %cst {dimension_numbers = #tpu.dot_dimension_numbers<[1], [0], [0], [1], [0, 0, 1, 1], [], []>} : vector<32x4xbf16>, vector<4x256xbf16>, vector<32x256xf32> -> vector<32x256xf32>
    %c0_4 = arith.constant 0 : index
    %c0_5 = arith.constant 0 : index
    %4 = vector.load %arg4[%c0_4, %c0_5] : memref<32x1xf32, #tpu.memory_space<vmem>>, vector<32x1xf32>
    %5 = vector.broadcast %4 : vector<32x1xf32> to vector<32x256xf32>
    %6 = arith.mulf %3, %5 : vector<32x256xf32>
    %c0_6 = arith.constant 0 : index
    %c0_7 = arith.constant 0 : index
    %7 = vector.load %arg5[%c0_6, %c0_7] : memref<32x1xf32, #tpu.memory_space<vmem>>, vector<32x1xf32>
    %8 = vector.broadcast %7 : vector<32x1xf32> to vector<32x256xf32>
    %9 = arith.addf %6, %8 : vector<32x256xf32>
    %cst_8 = arith.constant 0.000000e+00 : f32
    %10 = vector.broadcast %cst_8 : f32 to vector<32x256xf32>
    %11 = arith.maximumf %9, %10 : vector<32x256xf32>
    %12 = arith.truncf %11 : vector<32x256xf32> to vector<32x256xbf16>
    %c0_9 = arith.constant 0 : index
    %c0_10 = arith.constant 0 : index
    %c0_11 = arith.constant 0 : index
    %13 = vector.load %arg6[%c0_9, %c0_10, %c0_11] : memref<1x32x256xbf16, #tpu.memory_space<vmem>>, vector<1x32x256xbf16>
    %14 = vector.shape_cast %13 : vector<1x32x256xbf16> to vector<32x256xbf16>
    %15 = vector.shape_cast %12 : vector<32x256xbf16> to vector<1x32x256xbf16>
    tpu.vector_store %arg6[%c0_9, %c0_10, %c0_11], %15 {strides = array<i32>} : memref<1x32x256xbf16, #tpu.memory_space<vmem>>, vector<1x32x256xbf16>,
    %cst_12 = arith.constant 1.000000e+00 : bf16
    %16 = vector.broadcast %cst_12 : bf16 to vector<1x256xbf16>
    %17 = tpu.concatenate %12, %16 in 0 : vector<32x256xbf16>, vector<1x256xbf16> -> vector<33x256xbf16>
    %cst_13 = arith.constant dense<0.000000e+00> : vector<33x33xf32>
    %18 = tpu.matmul %17, %17, %cst_13 {dimension_numbers = #tpu.dot_dimension_numbers<[1], [1], [0], [0], [0, 0, 1, 0], [], []>} : vector<33x256xbf16>, vector<33x256xbf16>, vector<33x33xf32> -> vector<33x33xf32>
    %c0_14 = arith.constant 0 : index
    %c0_15 = arith.constant 0 : index
    %c0_16 = arith.constant 0 : index
    %c0_17 = arith.constant 0 : index
    %19 = vector.load %arg7[%c0_14, %c0_15, %c0_16, %c0_17] : memref<1x1x33x33xf32, #tpu.memory_space<vmem>>, vector<1x1x33x33xf32>
    %20 = vector.shape_cast %19 : vector<1x1x33x33xf32> to vector<33x33xf32>
    %21 = vector.shape_cast %18 : vector<33x33xf32> to vector<1x1x33x33xf32>
    tpu.vector_store %arg7[%c0_14, %c0_15, %c0_16, %c0_17], %21 {strides = array<i32>} : memref<1x1x33x33xf32, #tpu.memory_space<vmem>>, vector<1x1x33x33xf32>,
    return
  }
  func.func @transform_0(%arg0: i32, %arg1: i32) -> (i32, i32, i32) {
    %c0_i32 = arith.constant 0 : i32
    %c0_i32_0 = arith.constant 0 : i32
    return %arg0, %c0_i32, %arg1 : i32, i32, i32
  }
  func.func @transform_1(%arg0: i32, %arg1: i32) -> (i32, i32) {
    %c0_i32 = arith.constant 0 : i32
    %c0_i32_0 = arith.constant 0 : i32
    %c0_i32_1 = arith.constant 0 : i32
    return %c0_i32, %c0_i32_0 : i32, i32
  }
  func.func @transform_2(%arg0: i32, %arg1: i32) -> (i32, i32) {
    %c0_i32 = arith.constant 0 : i32
    %c0_i32_0 = arith.constant 0 : i32
    %c0_i32_1 = arith.constant 0 : i32
    return %c0_i32, %c0_i32_0 : i32, i32
  }
  func.func @transform_3(%arg0: i32, %arg1: i32) -> (i32, i32) {
    %c0_i32 = arith.constant 0 : i32
    %c0_i32_0 = arith.constant 0 : i32
    %c0_i32_1 = arith.constant 0 : i32
    return %c0_i32, %c0_i32_0 : i32, i32
  }
  func.func @transform_4(%arg0: i32, %arg1: i32) -> (i32, i32, i32) {
    %c0_i32 = arith.constant 0 : i32
    %c0_i32_0 = arith.constant 0 : i32
    return %arg0, %c0_i32, %arg1 : i32, i32, i32
  }
  func.func @transform_5(%arg0: i32, %arg1: i32) -> (i32, i32, i32, i32) {
    %c0_i32 = arith.constant 0 : i32
    %c0_i32_0 = arith.constant 0 : i32
    %c0_i32_1 = arith.constant 0 : i32
    return %arg0, %arg1, %c0_i32, %c0_i32_0 : i32, i32, i32, i32
  }
}

module attributes {stable_mosaic.version = 11 : i64} {
  func.func @_conv_bn_act_stats_kernel(%arg0: i32, %arg1: i32, %arg2: memref<1x32x256xbf16, #tpu.memory_space<vmem>>, %arg3: memref<64x32xbf16, #tpu.memory_space<vmem>>, %arg4: memref<64x1xf32, #tpu.memory_space<vmem>>, %arg5: memref<64x1xf32, #tpu.memory_space<vmem>>, %arg6: memref<1x64x256xbf16, #tpu.memory_space<vmem>>, %arg7: memref<1x1x65x65xf32, #tpu.memory_space<vmem>>) attributes {dimension_semantics = [#tpu.dimension_semantics<parallel>, #tpu.dimension_semantics<parallel>], iteration_bounds = array<i64: 2, 1>, scalar_prefetch = 0 : i64, scratch_operands = 0 : i64, tpu.core_type = #tpu.core_type<tc>, window_params = [{transform_indices = @transform_0, window_bounds = array<i64: 1, 32, 256>}, {pipeline_mode = #tpu.pipeline_mode<synchronous>, transform_indices = @transform_1, window_bounds = array<i64: 64, 32>}, {pipeline_mode = #tpu.pipeline_mode<synchronous>, transform_indices = @transform_2, window_bounds = array<i64: 64, 1>}, {pipeline_mode = #tpu.pipeline_mode<synchronous>, transform_indices = @transform_3, window_bounds = array<i64: 64, 1>}, {transform_indices = @transform_4, window_bounds = array<i64: 1, 64, 256>}, {transform_indices = @transform_5, window_bounds = array<i64: 1, 1, 65, 65>}]} {
    %c0 = arith.constant 0 : index
    %c0_0 = arith.constant 0 : index
    %c0_1 = arith.constant 0 : index
    %0 = vector.load %arg2[%c0, %c0_0, %c0_1] : memref<1x32x256xbf16, #tpu.memory_space<vmem>>, vector<1x32x256xbf16>
    %1 = vector.shape_cast %0 : vector<1x32x256xbf16> to vector<32x256xbf16>
    %c0_2 = arith.constant 0 : index
    %c0_3 = arith.constant 0 : index
    %2 = vector.load %arg3[%c0_2, %c0_3] : memref<64x32xbf16, #tpu.memory_space<vmem>>, vector<64x32xbf16>
    %cst = arith.constant dense<0.000000e+00> : vector<64x256xf32>
    %3 = tpu.matmul %2, %1, %cst {dimension_numbers = #tpu.dot_dimension_numbers<[1], [0], [0], [1], [0, 0, 1, 1], [], []>} : vector<64x32xbf16>, vector<32x256xbf16>, vector<64x256xf32> -> vector<64x256xf32>
    %c0_4 = arith.constant 0 : index
    %c0_5 = arith.constant 0 : index
    %4 = vector.load %arg4[%c0_4, %c0_5] : memref<64x1xf32, #tpu.memory_space<vmem>>, vector<64x1xf32>
    %5 = vector.broadcast %4 : vector<64x1xf32> to vector<64x256xf32>
    %6 = arith.mulf %3, %5 : vector<64x256xf32>
    %c0_6 = arith.constant 0 : index
    %c0_7 = arith.constant 0 : index
    %7 = vector.load %arg5[%c0_6, %c0_7] : memref<64x1xf32, #tpu.memory_space<vmem>>, vector<64x1xf32>
    %8 = vector.broadcast %7 : vector<64x1xf32> to vector<64x256xf32>
    %9 = arith.addf %6, %8 : vector<64x256xf32>
    %cst_8 = arith.constant 0.000000e+00 : f32
    %10 = vector.broadcast %cst_8 : f32 to vector<64x256xf32>
    %11 = arith.maximumf %9, %10 : vector<64x256xf32>
    %12 = arith.truncf %11 : vector<64x256xf32> to vector<64x256xbf16>
    %c0_9 = arith.constant 0 : index
    %c0_10 = arith.constant 0 : index
    %c0_11 = arith.constant 0 : index
    %13 = vector.load %arg6[%c0_9, %c0_10, %c0_11] : memref<1x64x256xbf16, #tpu.memory_space<vmem>>, vector<1x64x256xbf16>
    %14 = vector.shape_cast %13 : vector<1x64x256xbf16> to vector<64x256xbf16>
    %15 = vector.shape_cast %12 : vector<64x256xbf16> to vector<1x64x256xbf16>
    tpu.vector_store %arg6[%c0_9, %c0_10, %c0_11], %15 {strides = array<i32>} : memref<1x64x256xbf16, #tpu.memory_space<vmem>>, vector<1x64x256xbf16>,
    %cst_12 = arith.constant 1.000000e+00 : bf16
    %16 = vector.broadcast %cst_12 : bf16 to vector<1x256xbf16>
    %17 = tpu.concatenate %12, %16 in 0 : vector<64x256xbf16>, vector<1x256xbf16> -> vector<65x256xbf16>
    %cst_13 = arith.constant dense<0.000000e+00> : vector<65x65xf32>
    %18 = tpu.matmul %17, %17, %cst_13 {dimension_numbers = #tpu.dot_dimension_numbers<[1], [1], [0], [0], [0, 0, 1, 0], [], []>} : vector<65x256xbf16>, vector<65x256xbf16>, vector<65x65xf32> -> vector<65x65xf32>
    %c0_14 = arith.constant 0 : index
    %c0_15 = arith.constant 0 : index
    %c0_16 = arith.constant 0 : index
    %c0_17 = arith.constant 0 : index
    %19 = vector.load %arg7[%c0_14, %c0_15, %c0_16, %c0_17] : memref<1x1x65x65xf32, #tpu.memory_space<vmem>>, vector<1x1x65x65xf32>
    %20 = vector.shape_cast %19 : vector<1x1x65x65xf32> to vector<65x65xf32>
    %21 = vector.shape_cast %18 : vector<65x65xf32> to vector<1x1x65x65xf32>
    tpu.vector_store %arg7[%c0_14, %c0_15, %c0_16, %c0_17], %21 {strides = array<i32>} : memref<1x1x65x65xf32, #tpu.memory_space<vmem>>, vector<1x1x65x65xf32>,
    return
  }
  func.func @transform_0(%arg0: i32, %arg1: i32) -> (i32, i32, i32) {
    %c0_i32 = arith.constant 0 : i32
    %c0_i32_0 = arith.constant 0 : i32
    return %arg0, %c0_i32, %arg1 : i32, i32, i32
  }
  func.func @transform_1(%arg0: i32, %arg1: i32) -> (i32, i32) {
    %c0_i32 = arith.constant 0 : i32
    %c0_i32_0 = arith.constant 0 : i32
    %c0_i32_1 = arith.constant 0 : i32
    return %c0_i32, %c0_i32_0 : i32, i32
  }
  func.func @transform_2(%arg0: i32, %arg1: i32) -> (i32, i32) {
    %c0_i32 = arith.constant 0 : i32
    %c0_i32_0 = arith.constant 0 : i32
    %c0_i32_1 = arith.constant 0 : i32
    return %c0_i32, %c0_i32_0 : i32, i32
  }
  func.func @transform_3(%arg0: i32, %arg1: i32) -> (i32, i32) {
    %c0_i32 = arith.constant 0 : i32
    %c0_i32_0 = arith.constant 0 : i32
    %c0_i32_1 = arith.constant 0 : i32
    return %c0_i32, %c0_i32_0 : i32, i32
  }
  func.func @transform_4(%arg0: i32, %arg1: i32) -> (i32, i32, i32) {
    %c0_i32 = arith.constant 0 : i32
    %c0_i32_0 = arith.constant 0 : i32
    return %arg0, %c0_i32, %arg1 : i32, i32, i32
  }
  func.func @transform_5(%arg0: i32, %arg1: i32) -> (i32, i32, i32, i32) {
    %c0_i32 = arith.constant 0 : i32
    %c0_i32_0 = arith.constant 0 : i32
    %c0_i32_1 = arith.constant 0 : i32
    return %arg0, %arg1, %c0_i32, %c0_i32_0 : i32, i32, i32, i32
  }
}

module attributes {stable_mosaic.version = 11 : i64} {
  func.func @_conv_bn_act_kernel(%arg0: i32, %arg1: i32, %arg2: memref<1x64x256xbf16, #tpu.memory_space<vmem>>, %arg3: memref<32x64xbf16, #tpu.memory_space<vmem>>, %arg4: memref<32x1xf32, #tpu.memory_space<vmem>>, %arg5: memref<32x1xf32, #tpu.memory_space<vmem>>, %arg6: memref<1x32x256xbf16, #tpu.memory_space<vmem>>) attributes {dimension_semantics = [#tpu.dimension_semantics<parallel>, #tpu.dimension_semantics<parallel>], iteration_bounds = array<i64: 2, 1>, scalar_prefetch = 0 : i64, scratch_operands = 0 : i64, tpu.core_type = #tpu.core_type<tc>, window_params = [{transform_indices = @transform_0, window_bounds = array<i64: 1, 64, 256>}, {pipeline_mode = #tpu.pipeline_mode<synchronous>, transform_indices = @transform_1, window_bounds = array<i64: 32, 64>}, {pipeline_mode = #tpu.pipeline_mode<synchronous>, transform_indices = @transform_2, window_bounds = array<i64: 32, 1>}, {pipeline_mode = #tpu.pipeline_mode<synchronous>, transform_indices = @transform_3, window_bounds = array<i64: 32, 1>}, {transform_indices = @transform_4, window_bounds = array<i64: 1, 32, 256>}]} {
    %c0 = arith.constant 0 : index
    %c0_0 = arith.constant 0 : index
    %c0_1 = arith.constant 0 : index
    %0 = vector.load %arg2[%c0, %c0_0, %c0_1] : memref<1x64x256xbf16, #tpu.memory_space<vmem>>, vector<1x64x256xbf16>
    %1 = vector.shape_cast %0 : vector<1x64x256xbf16> to vector<64x256xbf16>
    %c0_2 = arith.constant 0 : index
    %c0_3 = arith.constant 0 : index
    %2 = vector.load %arg3[%c0_2, %c0_3] : memref<32x64xbf16, #tpu.memory_space<vmem>>, vector<32x64xbf16>
    %cst = arith.constant dense<0.000000e+00> : vector<32x256xf32>
    %3 = tpu.matmul %2, %1, %cst {dimension_numbers = #tpu.dot_dimension_numbers<[1], [0], [0], [1], [0, 0, 1, 1], [], []>} : vector<32x64xbf16>, vector<64x256xbf16>, vector<32x256xf32> -> vector<32x256xf32>
    %c0_4 = arith.constant 0 : index
    %c0_5 = arith.constant 0 : index
    %4 = vector.load %arg4[%c0_4, %c0_5] : memref<32x1xf32, #tpu.memory_space<vmem>>, vector<32x1xf32>
    %5 = vector.broadcast %4 : vector<32x1xf32> to vector<32x256xf32>
    %6 = arith.mulf %3, %5 : vector<32x256xf32>
    %c0_6 = arith.constant 0 : index
    %c0_7 = arith.constant 0 : index
    %7 = vector.load %arg5[%c0_6, %c0_7] : memref<32x1xf32, #tpu.memory_space<vmem>>, vector<32x1xf32>
    %8 = vector.broadcast %7 : vector<32x1xf32> to vector<32x256xf32>
    %9 = arith.addf %6, %8 : vector<32x256xf32>
    %cst_8 = arith.constant 0.000000e+00 : f32
    %10 = vector.broadcast %cst_8 : f32 to vector<32x256xf32>
    %11 = arith.maximumf %9, %10 : vector<32x256xf32>
    %12 = arith.truncf %11 : vector<32x256xf32> to vector<32x256xbf16>
    %c0_9 = arith.constant 0 : index
    %c0_10 = arith.constant 0 : index
    %c0_11 = arith.constant 0 : index
    %13 = vector.load %arg6[%c0_9, %c0_10, %c0_11] : memref<1x32x256xbf16, #tpu.memory_space<vmem>>, vector<1x32x256xbf16>
    %14 = vector.shape_cast %13 : vector<1x32x256xbf16> to vector<32x256xbf16>
    %15 = vector.shape_cast %12 : vector<32x256xbf16> to vector<1x32x256xbf16>
    tpu.vector_store %arg6[%c0_9, %c0_10, %c0_11], %15 {strides = array<i32>} : memref<1x32x256xbf16, #tpu.memory_space<vmem>>, vector<1x32x256xbf16>,
    return
  }
  func.func @transform_0(%arg0: i32, %arg1: i32) -> (i32, i32, i32) {
    %c0_i32 = arith.constant 0 : i32
    %c0_i32_0 = arith.constant 0 : i32
    return %arg0, %c0_i32, %arg1 : i32, i32, i32
  }
  func.func @transform_1(%arg0: i32, %arg1: i32) -> (i32, i32) {
    %c0_i32 = arith.constant 0 : i32
    %c0_i32_0 = arith.constant 0 : i32
    %c0_i32_1 = arith.constant 0 : i32
    return %c0_i32, %c0_i32_0 : i32, i32
  }
  func.func @transform_2(%arg0: i32, %arg1: i32) -> (i32, i32) {
    %c0_i32 = arith.constant 0 : i32
    %c0_i32_0 = arith.constant 0 : i32
    %c0_i32_1 = arith.constant 0 : i32
    return %c0_i32, %c0_i32_0 : i32, i32
  }
  func.func @transform_3(%arg0: i32, %arg1: i32) -> (i32, i32) {
    %c0_i32 = arith.constant 0 : i32
    %c0_i32_0 = arith.constant 0 : i32
    %c0_i32_1 = arith.constant 0 : i32
    return %c0_i32, %c0_i32_0 : i32, i32
  }
  func.func @transform_4(%arg0: i32, %arg1: i32) -> (i32, i32, i32) {
    %c0_i32 = arith.constant 0 : i32
    %c0_i32_0 = arith.constant 0 : i32
    return %arg0, %c0_i32, %arg1 : i32, i32, i32
  }
}

module attributes {stable_mosaic.version = 11 : i64} {
  func.func @_conv_bn_act_kernel(%arg0: i32, %arg1: i32, %arg2: memref<1x32x256xbf16, #tpu.memory_space<vmem>>, %arg3: memref<3x32xbf16, #tpu.memory_space<vmem>>, %arg4: memref<3x1xf32, #tpu.memory_space<vmem>>, %arg5: memref<3x1xf32, #tpu.memory_space<vmem>>, %arg6: memref<1x3x256xf32, #tpu.memory_space<vmem>>) attributes {dimension_semantics = [#tpu.dimension_semantics<parallel>, #tpu.dimension_semantics<parallel>], iteration_bounds = array<i64: 2, 1>, scalar_prefetch = 0 : i64, scratch_operands = 0 : i64, tpu.core_type = #tpu.core_type<tc>, window_params = [{transform_indices = @transform_0, window_bounds = array<i64: 1, 32, 256>}, {pipeline_mode = #tpu.pipeline_mode<synchronous>, transform_indices = @transform_1, window_bounds = array<i64: 3, 32>}, {pipeline_mode = #tpu.pipeline_mode<synchronous>, transform_indices = @transform_2, window_bounds = array<i64: 3, 1>}, {pipeline_mode = #tpu.pipeline_mode<synchronous>, transform_indices = @transform_3, window_bounds = array<i64: 3, 1>}, {transform_indices = @transform_4, window_bounds = array<i64: 1, 3, 256>}]} {
    %c0 = arith.constant 0 : index
    %c0_0 = arith.constant 0 : index
    %c0_1 = arith.constant 0 : index
    %0 = vector.load %arg2[%c0, %c0_0, %c0_1] : memref<1x32x256xbf16, #tpu.memory_space<vmem>>, vector<1x32x256xbf16>
    %1 = vector.shape_cast %0 : vector<1x32x256xbf16> to vector<32x256xbf16>
    %c0_2 = arith.constant 0 : index
    %c0_3 = arith.constant 0 : index
    %2 = vector.load %arg3[%c0_2, %c0_3] : memref<3x32xbf16, #tpu.memory_space<vmem>>, vector<3x32xbf16>
    %cst = arith.constant dense<0.000000e+00> : vector<3x256xf32>
    %3 = tpu.matmul %2, %1, %cst {dimension_numbers = #tpu.dot_dimension_numbers<[1], [0], [0], [1], [0, 0, 1, 1], [], []>} : vector<3x32xbf16>, vector<32x256xbf16>, vector<3x256xf32> -> vector<3x256xf32>
    %c0_4 = arith.constant 0 : index
    %c0_5 = arith.constant 0 : index
    %4 = vector.load %arg4[%c0_4, %c0_5] : memref<3x1xf32, #tpu.memory_space<vmem>>, vector<3x1xf32>
    %5 = vector.broadcast %4 : vector<3x1xf32> to vector<3x256xf32>
    %6 = arith.mulf %3, %5 : vector<3x256xf32>
    %c0_6 = arith.constant 0 : index
    %c0_7 = arith.constant 0 : index
    %7 = vector.load %arg5[%c0_6, %c0_7] : memref<3x1xf32, #tpu.memory_space<vmem>>, vector<3x1xf32>
    %8 = vector.broadcast %7 : vector<3x1xf32> to vector<3x256xf32>
    %9 = arith.addf %6, %8 : vector<3x256xf32>
    %10 = math.tanh %9 : vector<3x256xf32>
    %c0_8 = arith.constant 0 : index
    %c0_9 = arith.constant 0 : index
    %c0_10 = arith.constant 0 : index
    %11 = vector.load %arg6[%c0_8, %c0_9, %c0_10] : memref<1x3x256xf32, #tpu.memory_space<vmem>>, vector<1x3x256xf32>
    %12 = vector.shape_cast %11 : vector<1x3x256xf32> to vector<3x256xf32>
    %13 = vector.shape_cast %10 : vector<3x256xf32> to vector<1x3x256xf32>
    tpu.vector_store %arg6[%c0_8, %c0_9, %c0_10], %13 {strides = array<i32>} : memref<1x3x256xf32, #tpu.memory_space<vmem>>, vector<1x3x256xf32>,
    return
  }
  func.func @transform_0(%arg0: i32, %arg1: i32) -> (i32, i32, i32) {
    %c0_i32 = arith.constant 0 : i32
    %c0_i32_0 = arith.constant 0 : i32
    return %arg0, %c0_i32, %arg1 : i32, i32, i32
  }
  func.func @transform_1(%arg0: i32, %arg1: i32) -> (i32, i32) {
    %c0_i32 = arith.constant 0 : i32
    %c0_i32_0 = arith.constant 0 : i32
    %c0_i32_1 = arith.constant 0 : i32
    return %c0_i32, %c0_i32_0 : i32, i32
  }
  func.func @transform_2(%arg0: i32, %arg1: i32) -> (i32, i32) {
    %c0_i32 = arith.constant 0 : i32
    %c0_i32_0 = arith.constant 0 : i32
    %c0_i32_1 = arith.constant 0 : i32
    return %c0_i32, %c0_i32_0 : i32, i32
  }
  func.func @transform_3(%arg0: i32, %arg1: i32) -> (i32, i32) {
    %c0_i32 = arith.constant 0 : i32
    %c0_i32_0 = arith.constant 0 : i32
    %c0_i32_1 = arith.constant 0 : i32
    return %c0_i32, %c0_i32_0 : i32, i32
  }
  func.func @transform_4(%arg0: i32, %arg1: i32) -> (i32, i32, i32) {
    %c0_i32 = arith.constant 0 : i32
    %c0_i32_0 = arith.constant 0 : i32
    return %arg0, %c0_i32, %arg1 : i32, i32, i32
  }
}

</mosaic_0001>

<llo_original>
// kernel: netg_mlp_v1_forward.5
$region0: #{netg_mlp_v1_forward.5}
  #allocation0 [shape = 'u32[]', space=smem, size = 0x4, offset = 0x4, fixed_abs, tag = 'smem constant byte address 0x4 - core index']
  #allocation1 [shape = 'u32[144,128]{1,0:T(1,128)}', space=vmem, size = 0x12000, scoped, tag = 'internal scratch']
  %s0 = inlined_call_operand.vmem [shape: f32[2,4,256], index: 0, kind: input, shape index: {}]
  %s1 = inlined_call_operand.vmem [shape: bf16[2,4,256], index: 1, kind: output, shape index: {0}]
  %s2 = inlined_call_operand.vmem [shape: f32[2,1,5,5], index: 2, kind: output, shape index: {1}]
  %3 = xla_tuple %s1, %s2
  %s4 = sld [smem:[#allocation0]]
  $region45: #{netg_mlp_v1_forward.5} parent=0
    _
  %s6 = ssub.s32 1, %s4
  %s7 = scalar_select 0, %s6, %s4
  loop: start=0, step=1, limit=4
  $region2: #{netg_mlp_v1_forward.5} parent=0 // loop_pre_header
    _
  $region3: #{netg_mlp_v1_forward.5} parent=0 // loop_header
    %s9 = sphi 0, %s13
    %p10 = scmp.ge.s32.totalorder %s9, 4
    %s16 = sphi 0, %s28
    %s17 = sphi 0, %s24
    %s18 = sphi 0, %s16
    %s19 = sphi 0, %s17
    %s20 = sphi 0, %s18
    %s21 = sphi 0, %s19
    %s33 = sphi 0, %s35
    %s36 = sphi 0, %s33
    %s37 = sphi 0, %s36
    %s53 = sphi 0, %s37
    %s61 = sphi 0, %s63
    %s64 = sphi 0, %s61
    %s65 = sphi 0, %s64
    %s81 = sphi 0, %s65
    %s89 = sphi 0, %s91
    %s92 = sphi 0, %s89
    %s93 = sphi 0, %s92
    %s109 = sphi 0, %s93
  $region4: #{netg_mlp_v1_forward.5} parent=0 // loop_header_branch
    %12 = sbr.rel (%p10) target = $region8
  $region5: #{netg_mlp_v1_forward.5} parent=0 // loop_body
    %s14 = ssub.s32 %s9, 1
    %s15 = ssub.s32 %s9, 2
    %s22 = sadd.s32 1, %s17
    %p23 = scmp.ge.s32.totalorder %s22, 1
    %s24 = scalar_select %p23, 0, %s22
    %s25 = sadd.s32 1, %s16
    %s26 = scalar_select %p23, %s25, %s16
    %p27 = scmp.ge.s32.totalorder %s26, 2
    %s28 = scalar_select %p27, 0, %s26
    %s29 = ssub.s32 %s16, %s28
    %s30 = ssub.s32 %s17, %s24
    %s31 = sor.u32 %s29, %s30
    %p32 = scmp.eq.s32.totalorder %s31, 0
    %s34 = sadd.s32 %s33, 1
    %s35 = scalar_select %p32, %s33, %s34
    %p38 = pneg %p32
    %p39 = scmp.eq.s32.totalorder %s9, 1
    %p40 = por %p38, %p39
    %p41 = scmp.ne.s32.totalorder %s33, %s36
    %p42 = scmp.eq.s32.totalorder %s9, 0
    %p43 = por %p41, %p42
    %p44 = scmp.ne.s32.totalorder %s33, %s36
    %p45 = scmp.eq.s32.totalorder %s14, 1
    %p46 = por %p44, %p45
    %p47 = scmp.ne.s32.totalorder %s36, %s37
    %p48 = scmp.eq.s32.totalorder %s14, 0
    %p49 = por %p47, %p48
    %p50 = scmp.ne.s32.totalorder %s36, %s37
    %p51 = scmp.eq.s32.totalorder %s15, 1
    %p52 = por %p50, %p51
    %p54 = scmp.ne.s32.totalorder %s37, %s53
    %p55 = scmp.eq.s32.totalorder %s15, 0
    %p56 = por %p54, %p55
    %s57 = ssub.s32 %s16, %s28
    %s58 = ssub.s32 %s17, %s24
    %s59 = sor.u32 %s57, %s58
    %p60 = scmp.eq.s32.totalorder %s59, 0
    %s62 = sadd.s32 %s61, 1
    %s63 = scalar_select %p60, %s61, %s62
    %p66 = pneg %p60
    %p67 = scmp.eq.s32.totalorder %s9, 1
    %p68 = por %p66, %p67
    %p69 = scmp.ne.s32.totalorder %s61, %s64
    %p70 = scmp.eq.s32.totalorder %s9, 0
    %p71 = por %p69, %p70
    %p72 = scmp.ne.s32.totalorder %s61, %s64
    %p73 = scmp.eq.s32.totalorder %s14, 1
    %p74 = por %p72, %p73
    %p75 = scmp.ne.s32.totalorder %s64, %s65
    %p76 = scmp.eq.s32.totalorder %s14, 0
    %p77 = por %p75, %p76
    %p78 = scmp.ne.s32.totalorder %s64, %s65
    %p79 = scmp.eq.s32.totalorder %s15, 1
    %p80 = por %p78, %p79
    %p82 = scmp.ne.s32.totalorder %s65, %s81
    %p83 = scmp.eq.s32.totalorder %s15, 0
    %p84 = por %p82, %p83
    %s85 = ssub.s32 %s16, %s28
    %s86 = ssub.s32 %s17, %s24
    %s87 = sor.u32 %s85, %s86
    %p88 = scmp.eq.s32.totalorder %s87, 0
    %s90 = sadd.s32 %s89, 1
    %s91 = scalar_select %p88, %s89, %s90
    %p94 = pneg %p88
    %p95 = scmp.eq.s32.totalorder %s9, 1
    %p96 = por %p94, %p95
    %p97 = scmp.ne.s32.totalorder %s89, %s92
    %p98 = scmp.eq.s32.totalorder %s9, 0
    %p99 = por %p97, %p98
    %p100 = scmp.ne.s32.totalorder %s89, %s92
    %p101 = scmp.eq.s32.totalorder %s14, 1
    %p102 = por %p100, %p101
    %p103 = scmp.ne.s32.totalorder %s92, %s93
    %p104 = scmp.eq.s32.totalorder %s14, 0
    %p105 = por %p103, %p104
    %p106 = scmp.ne.s32.totalorder %s92, %s93
    %p107 = scmp.eq.s32.totalorder %s15, 1
    %p108 = por %p106, %p107
    %p110 = scmp.ne.s32.totalorder %s93, %s109
    %p111 = scmp.eq.s32.totalorder %s15, 0
    %p112 = por %p110, %p111
    %p113 = scmp.le.s32.totalorder 1, %s9
    %p114 = scmp.lt.s32.totalorder %s9, 3
    %p115 = pnand %p113, %p114
    %p116 = pneg %p115
    // Predicated region
    $region9: #{netg_mlp_v1_forward.5} parent=5 // pred_check
      _
    $region10: #{netg_mlp_v1_forward.5} parent=5 // pred_check_branch
      %118 = sbr.rel (%p115) target = $region12
    $region11: #{netg_mlp_v1_forward.5} parent=5 // pred_region
      %s119 = ssub.s32 %s9, 1
    $region12: #{netg_mlp_v1_forward.5} parent=5 // pred_fallthru
      _
    %p120 = scmp.lt.s32.totalorder %s9, 2
    // Predicated region
    $region13: #{netg_mlp_v1_forward.5} parent=5 // pred_check
      %p121 = pneg %p120
    $region14: #{netg_mlp_v1_forward.5} parent=5 // pred_check_branch
      %123 = sbr.rel (%p121) target = $region16
    $region15: #{netg_mlp_v1_forward.5} parent=5 // pred_region
      // Predicated region
      $region17: #{netg_mlp_v1_forward.5} parent=15 // pred_check
        %p124 = pneg %p43
      $region18: #{netg_mlp_v1_forward.5} parent=15 // pred_check_branch
        %126 = sbr.rel (%p124) target = $region20
      $region19: #{netg_mlp_v1_forward.5} parent=15 // pred_region
        %s127 = smul.u32 2, %s17
        %p128 = scmp.lt.s32.totalorder %s16, 1
        %s129 = scalar_select %p128, %s16, 1
        %p130 = scmp.lt.s32.totalorder %s127, 1
        %s131 = scalar_select %p130, %s127, 1
        %s132 = smul.addr %s129, 2
        %s133 = sadd.s32 %s131, %s132
        %s134 = smul.addr %s133, 4
        %s135 = scalar_lea.vmem %s0, %s134
        %s136 = smul.u32 2, %s17
      $region20: #{netg_mlp_v1_forward.5} parent=15 // pred_fallthru
        _
    $region16: #{netg_mlp_v1_forward.5} parent=5 // pred_fallthru
      _
    %p137 = scmp.le.s32.totalorder 1, %s9
    %p138 = scmp.lt.s32.totalorder %s9, 3
    %p139 = pnand %p137, %p138
    %p140 = pneg %p139
    // Predicated region
    $region21: #{netg_mlp_v1_forward.5} parent=5 // pred_check
      _
    $region22: #{netg_mlp_v1_forward.5} parent=5 // pred_check_branch
      %142 = sbr.rel (%p139) target = $region24
    $region23: #{netg_mlp_v1_forward.5} parent=5 // pred_region
      %s143 = ssub.s32 %s9, 1
      %s144 = smul.u32 2, %s19
      %p145 = scmp.lt.s32.totalorder %s18, 1
      %s146 = scalar_select %p145, %s18, 1
      %p147 = scmp.lt.s32.totalorder %s144, 1
      %s148 = scalar_select %p147, %s144, 1
      %s149 = smul.addr %s146, 2
      %s150 = sadd.s32 %s148, %s149
      %s151 = smul.addr %s150, 4
      %s152 = scalar_lea.vmem %s0, %s151
      %p153 = pneg %p49
      %p154 = pneg %p46
      %p155 = pneg %p77
      %p156 = pneg %p74
      %s157 = smul.u32 2, %s19
      %p158 = scmp.lt.s32.totalorder %s18, 1
      %s159 = scalar_select %p158, %s18, 1
      %p160 = scmp.lt.s32.totalorder %s157, 1
      %s161 = scalar_select %p160, %s157, 1
      %s162 = smul.addr %s159, 2
      %s163 = sadd.s32 %s161, %s162
      %s164 = smul.addr %s163, 2
      %s165 = scalar_lea.vmem %s1, %s164
      %p166 = pneg %p105
      %p167 = pneg %p102
      %p168 = scmp.lt.s32.totalorder %s18, 1
      %s169 = scalar_select %p168, %s18, 1
      %p170 = scmp.lt.s32.totalorder %s19, 0
      %s171 = scalar_select %p170, %s19, 0
      %s172 = sadd.s32 %s171, %s169
      %s173 = smul.addr %s172, 8
      %s174 = scalar_lea.vmem %s2, %s173
      %s175 = smul.u32 2, %s19
      %p176 = scmp.lt.s32.totalorder %s18, 1
      %s177 = scalar_select %p176, %s18, 1
      %p178 = scmp.lt.s32.totalorder %s175, 1
      %s179 = scalar_select %p178, %s175, 1
      %s180 = smul.addr %s177, 2
      %s181 = sadd.s32 %s179, %s180
      %s182 = smul.addr %s181, 4
      %s183 = scalar_lea.vmem %s0, %s182
      %s184 = smul.u32 2, %s19
      %s185 = smul.u32 2, %s19
      %p186 = scmp.lt.s32.totalorder %s18, 1
      %s187 = scalar_select %p186, %s18, 1
      %p188 = scmp.lt.s32.totalorder %s185, 1
      %s189 = scalar_select %p188, %s185, 1
      %s190 = smul.addr %s187, 2
      %s191 = sadd.s32 %s189, %s190
      %s192 = smul.addr %s191, 2
      %s193 = scalar_lea.vmem %s1, %s192
      %s194 = smul.u32 2, %s19
      %p195 = scmp.lt.s32.totalorder %s18, 1
      %s196 = scalar_select %p195, %s18, 1
      %p197 = scmp.lt.s32.totalorder %s19, 0
      %s198 = scalar_select %p197, %s19, 0
      %s199 = sadd.s32 %s198, %s196
      %s200 = smul.addr %s199, 8
      %s201 = scalar_lea.vmem %s2, %s200
      %v204 = vld [vmem:[%s183] sm:$0xff]
      %v206 = vcombine.high %v204, %v204
      %v208 = vpack.c.bf16 %v204, %v204
      %v209 = vpack.c.bf16 %v206, %v206
      %v212 = vcombine.low %v208, %v209
      %v214 = vunpack.c.l.s4 1983009808
      %v215 = vunpack.c.0.s8 %v214
      %v216 = vlaneseq
      %v217 = vshrl.u32 %v216, 7
      %v218 = vsub.s32 %v215, %v217
      %v219 = vrot.slane %v212, %v218
      %221 = vst [vmem:[%s193] sm:$0xf] %v219
      %vm222 = vcmask 1041408
      %v225 = vsel %vm222, %v208, 1065369472
      %v228 = vsel %vm222, %v209, 1065369472
      %230 = vmatprep.subr.bf16.mxu0 %v228
      %231 = vmatpush1.bf16.xpose.msra.mxu0 %v225
      %232 = vmatprep.subr.bf16.mxu0 0
      %233 = vmatpush1.bf16.xpose.msra.mxu0 0
      %234 = vmatprep.subr.bf16.mxu0 0
      %235 = vmatpush1.bf16.xpose.msra.mxu0 0
      %236 = vmatprep.subr.bf16.mxu0 0
      %237 = vmatpush1.bf16.xpose.msra.mxu0 0
      %238 = vmatprep.subr.bf16.mxu0 0
      %239 = vmatpush1.bf16.xpose.msra.mxu0 0
      %240 = vmatprep.subr.bf16.mxu0 0
      %241 = vmatpush1.bf16.xpose.msra.mxu0 0
      %242 = vmatprep.subr.bf16.mxu0 0
      %243 = vmatpush1.bf16.xpose.msra.mxu0 0
      %244 = vmatprep.subr.bf16.mxu0 0
      %245 = vmatpush1.bf16.xpose.msra.mxu0 0
      %246 = vmatprep.subr.bf16.mxu0 0
      %247 = vmatpush1.bf16.xpose.msra.mxu0 0
      %248 = vmatprep.subr.bf16.mxu0 0
      %249 = vmatpush1.bf16.xpose.msra.mxu0 0
      %250 = vmatprep.subr.bf16.mxu0 0
      %251 = vmatpush1.bf16.xpose.msra.mxu0 0
      %252 = vmatprep.subr.bf16.mxu0 0
      %253 = vmatpush1.bf16.xpose.msra.mxu0 0
      %254 = vmatprep.subr.bf16.mxu0 0
      %255 = vmatpush1.bf16.xpose.msra.mxu0 0
      %256 = vmatprep.subr.bf16.mxu0 0
      %257 = vmatpush1.bf16.xpose.msra.mxu0 0
      %258 = vmatprep.subr.bf16.mxu0 0
      %259 = vmatpush1.bf16.xpose.msra.mxu0 0
      %260 = vmatprep.subr.bf16.mxu0 0
      %261 = vmatpush1.bf16.xpose.msra.mxu0 0
      %262 = vmatprep.mubr.bf16.mxu0 %v228
      %263 = vmatmul.mubr.bf16.gmra.mrb[0].mxu0 %v225
      %v264 = vpop.f32.mrb[0].mxu0
      %v265 = vadd.f32 0.0, %v264
      %v266 = vpop.f32.mrb[0].mxu0
      %v267 = vpop.f32.mrb[0].mxu0
      %v268 = vpop.f32.mrb[0].mxu0
      %269 = vdwg.mxu0
      %vm270 = vcmask 36864
      %271 = vst.msk [vmem:[%s201] sm:$0x1f] %vm270, %v265
      %s272 = smul.u32 2, %s19
      %p273 = scmp.lt.s32.totalorder %s18, 1
      %s274 = scalar_select %p273, %s18, 1
      %p275 = scmp.lt.s32.totalorder %s272, 1
      %s276 = scalar_select %p275, %s272, 1
      %s277 = smul.addr %s274, 2
      %s278 = sadd.s32 %s276, %s277
      %s279 = smul.addr %s278, 2
      %s280 = scalar_lea.vmem %s1, %s279
      %p281 = scmp.lt.s32.totalorder %s18, 1
      %s282 = scalar_select %p281, %s18, 1
      %p283 = scmp.lt.s32.totalorder %s19, 0
      %s284 = scalar_select %p283, %s19, 0
      %s285 = sadd.s32 %s284, %s282
      %s286 = smul.addr %s285, 8
      %s287 = scalar_lea.vmem %s2, %s286
      // Predicated region
      $region25: #{netg_mlp_v1_forward.5} parent=23 // pred_check
        %p288 = pneg %p74
      $region26: #{netg_mlp_v1_forward.5} parent=23 // pred_check_branch
        %290 = sbr.rel (%p288) target = $region28
      $region27: #{netg_mlp_v1_forward.5} parent=23 // pred_region
        %s291 = smul.u32 2, %s19
      $region28: #{netg_mlp_v1_forward.5} parent=23 // pred_fallthru
        _
      // Predicated region
      $region29: #{netg_mlp_v1_forward.5} parent=23 // pred_check
        %p292 = pneg %p102
      $region30: #{netg_mlp_v1_forward.5} parent=23 // pred_check_branch
        %294 = sbr.rel (%p292) target = $region32
      $region31: #{netg_mlp_v1_forward.5} parent=23 // pred_region
        _
      $region32: #{netg_mlp_v1_forward.5} parent=23 // pred_fallthru
        _
    $region24: #{netg_mlp_v1_forward.5} parent=5 // pred_fallthru
      _
    %p295 = scmp.le.s32.totalorder 2, %s9
    // Predicated region
    $region33: #{netg_mlp_v1_forward.5} parent=5 // pred_check
      %p296 = pneg %p295
    $region34: #{netg_mlp_v1_forward.5} parent=5 // pred_check_branch
      %298 = sbr.rel (%p296) target = $region36
    $region35: #{netg_mlp_v1_forward.5} parent=5 // pred_region
      %s299 = ssub.s32 %s9, 2
      // Predicated region
      $region37: #{netg_mlp_v1_forward.5} parent=35 // pred_check
        %p300 = pneg %p80
      $region38: #{netg_mlp_v1_forward.5} parent=35 // pred_check_branch
        %302 = sbr.rel (%p300) target = $region40
      $region39: #{netg_mlp_v1_forward.5} parent=35 // pred_region
        %s303 = smul.u32 2, %s21
        %p304 = scmp.lt.s32.totalorder %s20, 1
        %s305 = scalar_select %p304, %s20, 1
        %p306 = scmp.lt.s32.totalorder %s303, 1
        %s307 = scalar_select %p306, %s303, 1
        %s308 = smul.addr %s305, 2
        %s309 = sadd.s32 %s307, %s308
        %s310 = smul.addr %s309, 2
        %s311 = scalar_lea.vmem %s1, %s310
      $region40: #{netg_mlp_v1_forward.5} parent=35 // pred_fallthru
        _
      // Predicated region
      $region41: #{netg_mlp_v1_forward.5} parent=35 // pred_check
        %p312 = pneg %p108
      $region42: #{netg_mlp_v1_forward.5} parent=35 // pred_check_branch
        %314 = sbr.rel (%p312) target = $region44
      $region43: #{netg_mlp_v1_forward.5} parent=35 // pred_region
        %p315 = scmp.lt.s32.totalorder %s20, 1
        %s316 = scalar_select %p315, %s20, 1
        %p317 = scmp.lt.s32.totalorder %s21, 0
        %s318 = scalar_select %p317, %s21, 0
        %s319 = sadd.s32 %s318, %s316
        %s320 = smul.addr %s319, 8
        %s321 = scalar_lea.vmem %s2, %s320
      $region44: #{netg_mlp_v1_forward.5} parent=35 // pred_fallthru
        _
    $region36: #{netg_mlp_v1_forward.5} parent=5 // pred_fallthru
      _
  $region6: #{netg_mlp_v1_forward.5} parent=0 // loop_footer
    %s13 = sadd.s32 1, %s9
  $region7: #{netg_mlp_v1_forward.5} parent=0 // loop_footer_branch
    %8 = sbr.rel target = $region3
  $region8: #{netg_mlp_v1_forward.5} parent=0 // loop_exit
    _

// kernel: netg_mlp_v1_forward.6
$region0: #{netg_mlp_v1_forward.6}
  #allocation0 [shape = 'u32[]', space=smem, size = 0x4, offset = 0x4, fixed_abs, tag = 'smem constant byte address 0x4 - core index']
  #allocation1 [shape = 'u32[144,128]{1,0:T(1,128)}', space=vmem, size = 0x12000, scoped, tag = 'internal scratch']
  %s0 = inlined_call_operand.vmem [shape: bf16[2,4,256], index: 0, kind: input, shape index: {}]
  %s1 = inlined_call_operand.vmem [shape: bf16[32,4], index: 1, kind: input, shape index: {}]
  %s2 = inlined_call_operand.vmem [shape: f32[32,1], index: 2, kind: input, shape index: {}]
  %s3 = inlined_call_operand.vmem [shape: f32[32,1], index: 3, kind: input, shape index: {}]
  %s4 = inlined_call_operand.vmem [shape: bf16[2,32,256], index: 4, kind: output, shape index: {0}]
  %s5 = inlined_call_operand.vmem [shape: f32[2,1,33,33], index: 5, kind: output, shape index: {1}]
  %6 = xla_tuple %s4, %s5
  %s7 = sld [smem:[#allocation0]]
  $region57: #{netg_mlp_v1_forward.6} parent=0
    _
  %s9 = ssub.s32 1, %s7
  %s10 = scalar_select 0, %s9, %s7
  loop: start=0, step=1, limit=4
  $region2: #{netg_mlp_v1_forward.6} parent=0 // loop_pre_header
    _
  $region3: #{netg_mlp_v1_forward.6} parent=0 // loop_header
    %s12 = sphi 0, %s16
    %p13 = scmp.ge.s32.totalorder %s12, 4
    %s19 = sphi 0, %s31
    %s20 = sphi 0, %s27
    %s21 = sphi 0, %s19
    %s22 = sphi 0, %s20
    %s23 = sphi 0, %s21
    %s24 = sphi 0, %s22
    %s36 = sphi 0, %s38
    %s39 = sphi 0, %s36
    %s40 = sphi 0, %s39
    %s56 = sphi 0, %s40
    %s60 = sphi 0, %s60
    %s62 = sphi 0, %s60
    %s63 = sphi 0, %s62
    %s77 = sphi 0, %s63
    %s81 = sphi 0, %s81
    %s83 = sphi 0, %s81
    %s84 = sphi 0, %s83
    %s98 = sphi 0, %s84
    %s102 = sphi 0, %s102
    %s104 = sphi 0, %s102
    %s105 = sphi 0, %s104
    %s119 = sphi 0, %s105
    %s127 = sphi 0, %s129
    %s130 = sphi 0, %s127
    %s131 = sphi 0, %s130
    %s147 = sphi 0, %s131
    %s155 = sphi 0, %s157
    %s158 = sphi 0, %s155
    %s159 = sphi 0, %s158
    %s175 = sphi 0, %s159
  $region4: #{netg_mlp_v1_forward.6} parent=0 // loop_header_branch
    %15 = sbr.rel (%p13) target = $region8
  $region5: #{netg_mlp_v1_forward.6} parent=0 // loop_body
    %s17 = ssub.s32 %s12, 1
    %s18 = ssub.s32 %s12, 2
    %s25 = sadd.s32 1, %s20
    %p26 = scmp.ge.s32.totalorder %s25, 1
    %s27 = scalar_select %p26, 0, %s25
    %s28 = sadd.s32 1, %s19
    %s29 = scalar_select %p26, %s28, %s19
    %p30 = scmp.ge.s32.totalorder %s29, 2
    %s31 = scalar_select %p30, 0, %s29
    %s32 = ssub.s32 %s19, %s31
    %s33 = ssub.s32 %s20, %s27
    %s34 = sor.u32 %s32, %s33
    %p35 = scmp.eq.s32.totalorder %s34, 0
    %s37 = sadd.s32 %s36, 1
    %s38 = scalar_select %p35, %s36, %s37
    %p41 = pneg %p35
    %p42 = scmp.eq.s32.totalorder %s12, 1
    %p43 = por %p41, %p42
    %p44 = scmp.ne.s32.totalorder %s36, %s39
    %p45 = scmp.eq.s32.totalorder %s12, 0
    %p46 = por %p44, %p45
    %p47 = scmp.ne.s32.totalorder %s36, %s39
    %p48 = scmp.eq.s32.totalorder %s17, 1
    %p49 = por %p47, %p48
    %p50 = scmp.ne.s32.totalorder %s39, %s40
    %p51 = scmp.eq.s32.totalorder %s17, 0
    %p52 = por %p50, %p51
    %p53 = scmp.ne.s32.totalorder %s39, %s40
    %p54 = scmp.eq.s32.totalorder %s18, 1
    %p55 = por %p53, %p54
    %p57 = scmp.ne.s32.totalorder %s40, %s56
    %p58 = scmp.eq.s32.totalorder %s18, 0
    %p59 = por %p57, %p58
    %s61 = sadd.s32 %s60, 1
    %p64 = scmp.eq.s32.totalorder %s12, 1
    %p65 = scmp.ne.s32.totalorder %s60, %s62
    %p66 = scmp.eq.s32.totalorder %s12, 0
    %p67 = por %p65, %p66
    %p68 = scmp.ne.s32.totalorder %s60, %s62
    %p69 = scmp.eq.s32.totalorder %s17, 1
    %p70 = por %p68, %p69
    %p71 = scmp.ne.s32.totalorder %s62, %s63
    %p72 = scmp.eq.s32.totalorder %s17, 0
    %p73 = por %p71, %p72
    %p74 = scmp.ne.s32.totalorder %s62, %s63
    %p75 = scmp.eq.s32.totalorder %s18, 1
    %p76 = por %p74, %p75
    %p78 = scmp.ne.s32.totalorder %s63, %s77
    %p79 = scmp.eq.s32.totalorder %s18, 0
    %p80 = por %p78, %p79
    %s82 = sadd.s32 %s81, 1
    %p85 = scmp.eq.s32.totalorder %s12, 1
    %p86 = scmp.ne.s32.totalorder %s81, %s83
    %p87 = scmp.eq.s32.totalorder %s12, 0
    %p88 = por %p86, %p87
    %p89 = scmp.ne.s32.totalorder %s81, %s83
    %p90 = scmp.eq.s32.totalorder %s17, 1
    %p91 = por %p89, %p90
    %p92 = scmp.ne.s32.totalorder %s83, %s84
    %p93 = scmp.eq.s32.totalorder %s17, 0
    %p94 = por %p92, %p93
    %p95 = scmp.ne.s32.totalorder %s83, %s84
    %p96 = scmp.eq.s32.totalorder %s18, 1
    %p97 = por %p95, %p96
    %p99 = scmp.ne.s32.totalorder %s84, %s98
    %p100 = scmp.eq.s32.totalorder %s18, 0
    %p101 = por %p99, %p100
    %s103 = sadd.s32 %s102, 1
    %p106 = scmp.eq.s32.totalorder %s12, 1
    %p107 = scmp.ne.s32.totalorder %s102, %s104
    %p108 = scmp.eq.s32.totalorder %s12, 0
    %p109 = por %p107, %p108
    %p110 = scmp.ne.s32.totalorder %s102, %s104
    %p111 = scmp.eq.s32.totalorder %s17, 1
    %p112 = por %p110, %p111
    %p113 = scmp.ne.s32.totalorder %s104, %s105
    %p114 = scmp.eq.s32.totalorder %s17, 0
    %p115 = por %p113, %p114
    %p116 = scmp.ne.s32.totalorder %s104, %s105
    %p117 = scmp.eq.s32.totalorder %s18, 1
    %p118 = por %p116, %p117
    %p120 = scmp.ne.s32.totalorder %s105, %s119
    %p121 = scmp.eq.s32.totalorder %s18, 0
    %p122 = por %p120, %p121
    %s123 = ssub.s32 %s19, %s31
    %s124 = ssub.s32 %s20, %s27
    %s125 = sor.u32 %s123, %s124
    %p126 = scmp.eq.s32.totalorder %s125, 0
    %s128 = sadd.s32 %s127, 1
    %s129 = scalar_select %p126, %s127, %s128
    %p132 = pneg %p126
    %p133 = scmp.eq.s32.totalorder %s12, 1
    %p134 = por %p132, %p133
    %p135 = scmp.ne.s32.totalorder %s127, %s130
    %p136 = scmp.eq.s32.totalorder %s12, 0
    %p137 = por %p135, %p136
    %p138 = scmp.ne.s32.totalorder %s127, %s130
    %p139 = scmp.eq.s32.totalorder %s17, 1
    %p140 = por %p138, %p139
    %p141 = scmp.ne.s32.totalorder %s130, %s131
    %p142 = scmp.eq.s32.totalorder %s17, 0
    %p143 = por %p141, %p142
    %p144 = scmp.ne.s32.totalorder %s130, %s131
    %p145 = scmp.eq.s32.totalorder %s18, 1
    %p146 = por %p144, %p145
    %p148 = scmp.ne.s32.totalorder %s131, %s147
    %p149 = scmp.eq.s32.totalorder %s18, 0
    %p150 = por %p148, %p149
    %s151 = ssub.s32 %s19, %s31
    %s152 = ssub.s32 %s20, %s27
    %s153 = sor.u32 %s151, %s152
    %p154 = scmp.eq.s32.totalorder %s153, 0
    %s156 = sadd.s32 %s155, 1
    %s157 = scalar_select %p154, %s155, %s156
    %p160 = pneg %p154
    %p161 = scmp.eq.s32.totalorder %s12, 1
    %p162 = por %p160, %p161
    %p163 = scmp.ne.s32.totalorder %s155, %s158
    %p164 = scmp.eq.s32.totalorder %s12, 0
    %p165 = por %p163, %p164
    %p166 = scmp.ne.s32.totalorder %s155, %s158
    %p167 = scmp.eq.s32.totalorder %s17, 1
    %p168 = por %p166, %p167
    %p169 = scmp.ne.s32.totalorder %s158, %s159
    %p170 = scmp.eq.s32.totalorder %s17, 0
    %p171 = por %p169, %p170
    %p172 = scmp.ne.s32.totalorder %s158, %s159
    %p173 = scmp.eq.s32.totalorder %s18, 1
    %p174 = por %p172, %p173
    %p176 = scmp.ne.s32.totalorder %s159, %s175
    %p177 = scmp.eq.s32.totalorder %s18, 0
    %p178 = por %p176, %p177
    %p179 = scmp.le.s32.totalorder 1, %s12
    %p180 = scmp.lt.s32.totalorder %s12, 3
    %p181 = pnand %p179, %p180
    %p182 = pneg %p181
    // Predicated region
    $region9: #{netg_mlp_v1_forward.6} parent=5 // pred_check
      _
    $region10: #{netg_mlp_v1_forward.6} parent=5 // pred_check_branch
      %184 = sbr.rel (%p181) target = $region12
    $region11: #{netg_mlp_v1_forward.6} parent=5 // pred_region
      %s185 = ssub.s32 %s12, 1
      // Predicated region
      $region13: #{netg_mlp_v1_forward.6} parent=11 // pred_check
        %p186 = pneg %p73
      $region14: #{netg_mlp_v1_forward.6} parent=11 // pred_check_branch
        %188 = sbr.rel (%p186) target = $region16
      $region15: #{netg_mlp_v1_forward.6} parent=11 // pred_region
        _
      $region16: #{netg_mlp_v1_forward.6} parent=11 // pred_fallthru
        _
      // Predicated region
      $region17: #{netg_mlp_v1_forward.6} parent=11 // pred_check
        %p189 = pneg %p94
      $region18: #{netg_mlp_v1_forward.6} parent=11 // pred_check_branch
        %191 = sbr.rel (%p189) target = $region20
      $region19: #{netg_mlp_v1_forward.6} parent=11 // pred_region
        _
      $region20: #{netg_mlp_v1_forward.6} parent=11 // pred_fallthru
        _
      // Predicated region
      $region21: #{netg_mlp_v1_forward.6} parent=11 // pred_check
        %p192 = pneg %p115
      $region22: #{netg_mlp_v1_forward.6} parent=11 // pred_check_branch
        %194 = sbr.rel (%p192) target = $region24
      $region23: #{netg_mlp_v1_forward.6} parent=11 // pred_region
        _
      $region24: #{netg_mlp_v1_forward.6} parent=11 // pred_fallthru
        _
    $region12: #{netg_mlp_v1_forward.6} parent=5 // pred_fallthru
      _
    %p195 = scmp.lt.s32.totalorder %s12, 2
    // Predicated region
    $region25: #{netg_mlp_v1_forward.6} parent=5 // pred_check
      %p196 = pneg %p195
    $region26: #{netg_mlp_v1_forward.6} parent=5 // pred_check_branch
      %198 = sbr.rel (%p196) target = $region28
    $region27: #{netg_mlp_v1_forward.6} parent=5 // pred_region
      // Predicated region
      $region29: #{netg_mlp_v1_forward.6} parent=27 // pred_check
        %p199 = pneg %p46
      $region30: #{netg_mlp_v1_forward.6} parent=27 // pred_check_branch
        %201 = sbr.rel (%p199) target = $region32
      $region31: #{netg_mlp_v1_forward.6} parent=27 // pred_region
        %s202 = smul.u32 2, %s20
        %p203 = scmp.lt.s32.totalorder %s19, 1
        %s204 = scalar_select %p203, %s19, 1
        %p205 = scmp.lt.s32.totalorder %s202, 1
        %s206 = scalar_select %p205, %s202, 1
        %s207 = smul.addr %s204, 2
        %s208 = sadd.s32 %s206, %s207
        %s209 = smul.addr %s208, 2
        %s210 = scalar_lea.vmem %s0, %s209
        %s211 = smul.u32 2, %s20
      $region32: #{netg_mlp_v1_forward.6} parent=27 // pred_fallthru
        _
    $region28: #{netg_mlp_v1_forward.6} parent=5 // pred_fallthru
      _
    %p212 = scmp.le.s32.totalorder 1, %s12
    %p213 = scmp.lt.s32.totalorder %s12, 3
    %p214 = pnand %p212, %p213
    %p215 = pneg %p214
    // Predicated region
    $region33: #{netg_mlp_v1_forward.6} parent=5 // pred_check
      _
    $region34: #{netg_mlp_v1_forward.6} parent=5 // pred_check_branch
      %217 = sbr.rel (%p214) target = $region36
    $region35: #{netg_mlp_v1_forward.6} parent=5 // pred_region
      %s218 = ssub.s32 %s12, 1
      %s219 = smul.u32 2, %s22
      %p220 = scmp.lt.s32.totalorder %s21, 1
      %s221 = scalar_select %p220, %s21, 1
      %p222 = scmp.lt.s32.totalorder %s219, 1
      %s223 = scalar_select %p222, %s219, 1
      %s224 = smul.addr %s221, 2
      %s225 = sadd.s32 %s223, %s224
      %s226 = smul.addr %s225, 2
      %s227 = scalar_lea.vmem %s0, %s226
      %p228 = pneg %p52
      %p229 = pneg %p49
      %p230 = pneg %p73
      %p231 = pneg %p70
      %p232 = pneg %p94
      %p233 = pneg %p91
      %p234 = pneg %p115
      %p235 = pneg %p112
      %p236 = pneg %p143
      %p237 = pneg %p140
      %s238 = smul.u32 2, %s22
      %p239 = scmp.lt.s32.totalorder %s21, 1
      %s240 = scalar_select %p239, %s21, 1
      %p241 = scmp.lt.s32.totalorder %s238, 1
      %s242 = scalar_select %p241, %s238, 1
      %s243 = smul.addr %s240, 8
      %s244 = sadd.s32 %s242, %s243
      %s245 = smul.addr %s244, 4
      %s246 = scalar_lea.vmem %s4, %s245
      %p247 = pneg %p171
      %p248 = pneg %p168
      %p249 = scmp.lt.s32.totalorder %s21, 1
      %s250 = scalar_select %p249, %s21, 1
      %p251 = scmp.lt.s32.totalorder %s22, 0
      %s252 = scalar_select %p251, %s22, 0
      %s253 = smul.addr %s252, 5
      %s254 = smul.addr %s250, 5
      %s255 = sadd.s32 %s253, %s254
      %s256 = smul.addr %s255, 8
      %s257 = scalar_lea.vmem %s5, %s256
      %s258 = smul.u32 2, %s22
      %p259 = scmp.lt.s32.totalorder %s21, 1
      %s260 = scalar_select %p259, %s21, 1
      %p261 = scmp.lt.s32.totalorder %s258, 1
      %s262 = scalar_select %p261, %s258, 1
      %s263 = smul.addr %s260, 2
      %s264 = sadd.s32 %s262, %s263
      %s265 = smul.addr %s264, 2
      %s266 = scalar_lea.vmem %s0, %s265
      %s267 = smul.u32 2, %s22
      %s268 = smul.u32 2, %s22
      %p269 = scmp.lt.s32.totalorder %s21, 1
      %s270 = scalar_select %p269, %s21, 1
      %p271 = scmp.lt.s32.totalorder %s268, 1
      %s272 = scalar_select %p271, %s268, 1
      %s273 = smul.addr %s270, 8
      %s274 = sadd.s32 %s272, %s273
      %s275 = smul.addr %s274, 4
      %s276 = scalar_lea.vmem %s4, %s275
      %s277 = smul.u32 2, %s22
      %p278 = scmp.lt.s32.totalorder %s21, 1
      %s279 = scalar_select %p278, %s21, 1
      %p280 = scmp.lt.s32.totalorder %s22, 0
      %s281 = scalar_select %p280, %s22, 0
      %s282 = smul.addr %s281, 5
      %s283 = smul.addr %s279, 5
      %s284 = sadd.s32 %s282, %s283
      %s285 = smul.addr %s284, 8
      %s286 = scalar_lea.vmem %s5, %s285
      %v289 = vld [vmem:[%s266] sm:$0xf]
      %v290 = vld [vmem:[%s1] sm:$0xf]
      %v291 = vld [vmem:[%s1 + $0x4] sm:$0xf]
      %v292 = vld [vmem:[%s1 + $0x8] sm:$0xf]
      %v293 = vld [vmem:[%s1 + $0xc] sm:$0xf]
      %v298 = vunpack.c.l.b16 %v290
      %v299 = vunpack.c.l.b16 %v291
      %v300 = vunpack.c.l.b16 %v292
      %v301 = vunpack.c.l.b16 %v293
      %v302 = vpack.c.b16 %v299, %v298
      %v303 = vpack.c.b16 %v301, %v300
      %v306 = vunpack.c.l.s4 1983009808
      %v307 = vunpack.c.0.s8 %v306
      %v308 = vlaneseq
      %v309 = vshrl.u32 %v308, 7
      %v310 = vsub.s32 %v307, %v309
      %v311 = vrot.slane %v289, %v310
      %v312 = vcombine.high %v311, %v311
      %vm313 = vcmask 31744
      %v315 = vsel %vm313, %v302, 0
      %v318 = vsel %vm313, %v303, 0
      %vm320 = vcmask 1041408
      %v322 = vsel %vm320, %v311, 0
      %v325 = vsel %vm320, %v312, 0
      %327 = vmatprep.subr.bf16.mxu0 %v325
      %328 = vmatpush1.bf16.msra.mxu0 %v322
      %329 = vmatprep.subr.bf16.mxu0 0
      %330 = vmatpush1.bf16.msra.mxu0 0
      %331 = vmatprep.subr.bf16.mxu0 0
      %332 = vmatpush1.bf16.msra.mxu0 0
      %333 = vmatprep.subr.bf16.mxu0 0
      %334 = vmatpush1.bf16.msra.mxu0 0
      %335 = vmatprep.subr.bf16.mxu0 0
      %336 = vmatpush1.bf16.msra.mxu0 0
      %337 = vmatprep.subr.bf16.mxu0 0
      %338 = vmatpush1.bf16.msra.mxu0 0
      %339 = vmatprep.subr.bf16.mxu0 0
      %340 = vmatpush1.bf16.msra.mxu0 0
      %341 = vmatprep.subr.bf16.mxu0 0
      %342 = vmatpush1.bf16.msra.mxu0 0
      %343 = vmatprep.subr.bf16.mxu0 0
      %344 = vmatpush1.bf16.msra.mxu0 0
      %345 = vmatprep.subr.bf16.mxu0 0
      %346 = vmatpush1.bf16.msra.mxu0 0
      %347 = vmatprep.subr.bf16.mxu0 0
      %348 = vmatpush1.bf16.msra.mxu0 0
      %349 = vmatprep.subr.bf16.mxu0 0
      %350 = vmatpush1.bf16.msra.mxu0 0
      %351 = vmatprep.subr.bf16.mxu0 0
      %352 = vmatpush1.bf16.msra.mxu0 0
      %353 = vmatprep.subr.bf16.mxu0 0
      %354 = vmatpush1.bf16.msra.mxu0 0
      %355 = vmatprep.subr.bf16.mxu0 0
      %356 = vmatpush1.bf16.msra.mxu0 0
      %357 = vmatprep.subr.bf16.mxu0 0
      %358 = vmatpush1.bf16.msra.mxu0 0
      %359 = vmatprep.mubr.bf16.mxu0 0
      %360 = vmatmul.mubr.bf16.gmra.mrb[0].mxu0 %v315
      %v361 = vpop.f32.mrb[0].mxu0
      %v362 = vadd.f32 0.0, %v361
      %v363 = vpop.f32.mrb[0].mxu0
      %v364 = vadd.f32 0.0, %v363
      %v365 = vpop.f32.mrb[0].mxu0
      %v366 = vadd.f32 0.0, %v365
      %v367 = vpop.f32.mrb[0].mxu0
      %v368 = vadd.f32 0.0, %v367
      %369 = vmatprep.mubr.bf16.mxu0 0
      %370 = vmatmul.mubr.bf16.gmra.mrb[0].mxu0 %v318
      %v371 = vpop.f32.mrb[0].mxu0
      %v372 = vadd.f32 0.0, %v371
      %v373 = vpop.f32.mrb[0].mxu0
      %v374 = vadd.f32 0.0, %v373
      %v375 = vpop.f32.mrb[0].mxu0
      %v376 = vadd.f32 0.0, %v375
      %v377 = vpop.f32.mrb[0].mxu0
      %v378 = vadd.f32 0.0, %v377
      %379 = vdwg.mxu0
      %v380 = vld [vmem:[%s2] sm:$0xff]
      %v381 = vld [vmem:[%s2 + $0x8] sm:$0xff]
      %v382 = vld [vmem:[%s2 + $0x10] sm:$0xff]
      %v383 = vld [vmem:[%s2 + $0x18] sm:$0xff]
      %385 = vset.pattern.permute.xlu0 0
      %386 = vperm.xlu0 %385, %v380
      %v387 = vpop.permute.xlu0 %386
      %390 = vset.pattern.permute.xlu0 0
      %391 = vperm.xlu0 %390, %v381
      %v392 = vpop.permute.xlu0 %391
      %395 = vset.pattern.permute.xlu0 0
      %396 = vperm.xlu0 %395, %v382
      %v397 = vpop.permute.xlu0 %396
      %400 = vset.pattern.permute.xlu0 0
      %401 = vperm.xlu0 %400, %v383
      %v402 = vpop.permute.xlu0 %401
      %v404 = vmul.f32 %v362, %v387
      %v405 = vmul.f32 %v364, %v387
      %v406 = vmul.f32 %v366, %v392
      %v407 = vmul.f32 %v368, %v392
      %v408 = vmul.f32 %v372, %v397
      %v409 = vmul.f32 %v374, %v397
      %v410 = vmul.f32 %v376, %v402
      %v411 = vmul.f32 %v378, %v402
      %v412 = vld [vmem:[%s3] sm:$0xff]
      %v413 = vld [vmem:[%s3 + $0x8] sm:$0xff]
      %v414 = vld [vmem:[%s3 + $0x10] sm:$0xff]
      %v415 = vld [vmem:[%s3 + $0x18] sm:$0xff]
      %417 = vset.pattern.permute.xlu0 0
      %418 = vperm.xlu0 %417, %v412
      %v419 = vpop.permute.xlu0 %418
      %422 = vset.pattern.permute.xlu0 0
      %423 = vperm.xlu0 %422, %v413
      %v424 = vpop.permute.xlu0 %423
      %427 = vset.pattern.permute.xlu0 0
      %428 = vperm.xlu0 %427, %v414
      %v429 = vpop.permute.xlu0 %428
      %432 = vset.pattern.permute.xlu0 0
      %433 = vperm.xlu0 %432, %v415
      %v434 = vpop.permute.xlu0 %433
      %v436 = vadd.f32 %v404, %v419
      %v437 = vadd.f32 %v405, %v419
      %v438 = vadd.f32 %v406, %v424
      %v439 = vadd.f32 %v407, %v424
      %v440 = vadd.f32 %v408, %v429
      %v441 = vadd.f32 %v409, %v429
      %v442 = vadd.f32 %v410, %v434
      %v443 = vadd.f32 %v411, %v434
      %v444 = vmax.f32 %v436, 0.0
      %v445 = vmax.f32 %v437, 0.0
      %v446 = vmax.f32 %v438, 0.0
      %v447 = vmax.f32 %v439, 0.0
      %v448 = vmax.f32 %v440, 0.0
      %v449 = vmax.f32 %v441, 0.0
      %v450 = vmax.f32 %v442, 0.0
      %v451 = vmax.f32 %v443, 0.0
      %v452 = vpack.c.bf16 %v446, %v444
      %v453 = vpack.c.bf16 %v447, %v445
      %v454 = vpack.c.bf16 %v450, %v448
      %v455 = vpack.c.bf16 %v451, %v449
      %v460 = vunpack.c.l.b16 %v452
      %v461 = vunpack.c.l.b16 %v453
      %v462 = vunpack.c.h.b16 %v452
      %v463 = vunpack.c.h.b16 %v453
      %v464 = vunpack.c.l.b16 %v454
      %v465 = vunpack.c.l.b16 %v455
      %v466 = vunpack.c.h.b16 %v454
      %v467 = vunpack.c.h.b16 %v455
      %v468 = vpack.c.b16 %v461, %v460
      %v469 = vpack.c.b16 %v463, %v462
      %v470 = vpack.c.b16 %v465, %v464
      %v471 = vpack.c.b16 %v467, %v466
      %476 = vst [vmem:[%s276] sm:$0xff] %v468
      %477 = vst [vmem:[%s276 + $0x8] sm:$0xff] %v469
      %478 = vst [vmem:[%s276 + $0x10] sm:$0xff] %v470
      %479 = vst [vmem:[%s276 + $0x18] sm:$0xff] %v471
      %480 = vmatprep.subr.bf16.mxu0 %v453
      %481 = vmatpush1.bf16.xpose.msra.mxu0 %v452
      %482 = vmatprep.subr.bf16.mxu0 %v455
      %483 = vmatpush1.bf16.xpose.msra.mxu0 %v454
      %484 = vmatprep.subr.bf16.mxu0 1065369472
      %485 = vmatpush1.bf16.xpose.msra.mxu0 1065369472
      %486 = vmatprep.subr.bf16.mxu0 0
      %487 = vmatpush1.bf16.xpose.msra.mxu0 0
      %488 = vmatprep.subr.bf16.mxu0 0
      %489 = vmatpush1.bf16.xpose.msra.mxu0 0
      %490 = vmatprep.subr.bf16.mxu0 0
      %491 = vmatpush1.bf16.xpose.msra.mxu0 0
      %492 = vmatprep.subr.bf16.mxu0 0
      %493 = vmatpush1.bf16.xpose.msra.mxu0 0
      %494 = vmatprep.subr.bf16.mxu0 0
      %495 = vmatpush1.bf16.xpose.msra.mxu0 0
      %496 = vmatprep.subr.bf16.mxu0 0
      %497 = vmatpush1.bf16.xpose.msra.mxu0 0
      %498 = vmatprep.subr.bf16.mxu0 0
      %499 = vmatpush1.bf16.xpose.msra.mxu0 0
      %500 = vmatprep.subr.bf16.mxu0 0
      %501 = vmatpush1.bf16.xpose.msra.mxu0 0
      %502 = vmatprep.subr.bf16.mxu0 0
      %503 = vmatpush1.bf16.xpose.msra.mxu0 0
      %504 = vmatprep.subr.bf16.mxu0 0
      %505 = vmatpush1.bf16.xpose.msra.mxu0 0
      %506 = vmatprep.subr.bf16.mxu0 0
      %507 = vmatpush1.bf16.xpose.msra.mxu0 0
      %508 = vmatprep.subr.bf16.mxu0 0
      %509 = vmatpush1.bf16.xpose.msra.mxu0 0
      %510 = vmatprep.subr.bf16.mxu0 0
      %511 = vmatpush1.bf16.xpose.msra.mxu0 0
      %512 = vmatprep.mubr.bf16.mxu0 %v453
      %513 = vmatmul.mubr.bf16.gmra.mrb[0].mxu0 %v452
      %v514 = vpop.f32.mrb[0].mxu0
      %v515 = vadd.f32 0.0, %v514
      %v516 = vpop.f32.mrb[0].mxu0
      %v517 = vpop.f32.mrb[0].mxu0
      %v518 = vadd.f32 0.0, %v517
      %v519 = vpop.f32.mrb[0].mxu0
      %520 = vmatprep.mubr.bf16.mxu0 %v455
      %521 = vmatmul.mubr.bf16.gmra.mrb[0].mxu0 %v454
      %v522 = vpop.f32.mrb[0].mxu0
      %v523 = vadd.f32 0.0, %v522
      %v524 = vpop.f32.mrb[0].mxu0
      %v525 = vpop.f32.mrb[0].mxu0
      %v526 = vadd.f32 0.0, %v525
      %v527 = vpop.f32.mrb[0].mxu0
      %528 = vmatprep.mubr.bf16.mxu0 1065369472
      %529 = vmatmul.mubr.bf16.gmra.mrb[0].mxu0 1065369472
      %v530 = vpop.f32.mrb[0].mxu0
      %v531 = vadd.f32 0.0, %v530
      %v532 = vpop.f32.mrb[0].mxu0
      %v533 = vpop.f32.mrb[0].mxu0
      %v534 = vpop.f32.mrb[0].mxu0
      %535 = vdwg.mxu0
      %vm536 = vcmask 269312
      %537 = vst.msk [vmem:[%s286] sm:$0xff] %vm536, %v515
      %538 = vst.msk [vmem:[%s286 + $0x8] sm:$0xff] %vm536, %v518
      %539 = vst.msk [vmem:[%s286 + $0x10] sm:$0xff] %vm536, %v523
      %540 = vst.msk [vmem:[%s286 + $0x18] sm:$0xff] %vm536, %v526
      %vm541 = vcmask 262144
      %542 = vst.msk [vmem:[%s286 + $0x20] sm:$0x1] %vm541, %v531
      %s543 = smul.u32 2, %s22
      %p544 = scmp.lt.s32.totalorder %s21, 1
      %s545 = scalar_select %p544, %s21, 1
      %p546 = scmp.lt.s32.totalorder %s543, 1
      %s547 = scalar_select %p546, %s543, 1
      %s548 = smul.addr %s545, 8
      %s549 = sadd.s32 %s547, %s548
      %s550 = smul.addr %s549, 4
      %s551 = scalar_lea.vmem %s4, %s550
      %p552 = scmp.lt.s32.totalorder %s21, 1
      %s553 = scalar_select %p552, %s21, 1
      %p554 = scmp.lt.s32.totalorder %s22, 0
      %s555 = scalar_select %p554, %s22, 0
      %s556 = smul.addr %s555, 5
      %s557 = smul.addr %s553, 5
      %s558 = sadd.s32 %s556, %s557
      %s559 = smul.addr %s558, 8
      %s560 = scalar_lea.vmem %s5, %s559
      // Predicated region
      $region37: #{netg_mlp_v1_forward.6} parent=35 // pred_check
        %p561 = pneg %p140
      $region38: #{netg_mlp_v1_forward.6} parent=35 // pred_check_branch
        %563 = sbr.rel (%p561) target = $region40
      $region39: #{netg_mlp_v1_forward.6} parent=35 // pred_region
        %s564 = smul.u32 2, %s22
      $region40: #{netg_mlp_v1_forward.6} parent=35 // pred_fallthru
        _
      // Predicated region
      $region41: #{netg_mlp_v1_forward.6} parent=35 // pred_check
        %p565 = pneg %p168
      $region42: #{netg_mlp_v1_forward.6} parent=35 // pred_check_branch
        %567 = sbr.rel (%p565) target = $region44
      $region43: #{netg_mlp_v1_forward.6} parent=35 // pred_region
        _
      $region44: #{netg_mlp_v1_forward.6} parent=35 // pred_fallthru
        _
    $region36: #{netg_mlp_v1_forward.6} parent=5 // pred_fallthru
      _
    %p568 = scmp.le.s32.totalorder 2, %s12
    // Predicated region
    $region45: #{netg_mlp_v1_forward.6} parent=5 // pred_check
      %p569 = pneg %p568
    $region46: #{netg_mlp_v1_forward.6} parent=5 // pred_check_branch
      %571 = sbr.rel (%p569) target = $region48
    $region47: #{netg_mlp_v1_forward.6} parent=5 // pred_region
      %s572 = ssub.s32 %s12, 2
      // Predicated region
      $region49: #{netg_mlp_v1_forward.6} parent=47 // pred_check
        %p573 = pneg %p146
      $region50: #{netg_mlp_v1_forward.6} parent=47 // pred_check_branch
        %575 = sbr.rel (%p573) target = $region52
      $region51: #{netg_mlp_v1_forward.6} parent=47 // pred_region
        %s576 = smul.u32 2, %s24
        %p577 = scmp.lt.s32.totalorder %s23, 1
        %s578 = scalar_select %p577, %s23, 1
        %p579 = scmp.lt.s32.totalorder %s576, 1
        %s580 = scalar_select %p579, %s576, 1
        %s581 = smul.addr %s578, 8
        %s582 = sadd.s32 %s580, %s581
        %s583 = smul.addr %s582, 4
        %s584 = scalar_lea.vmem %s4, %s583
      $region52: #{netg_mlp_v1_forward.6} parent=47 // pred_fallthru
        _
      // Predicated region
      $region53: #{netg_mlp_v1_forward.6} parent=47 // pred_check
        %p585 = pneg %p174
      $region54: #{netg_mlp_v1_forward.6} parent=47 // pred_check_branch
        %587 = sbr.rel (%p585) target = $region56
      $region55: #{netg_mlp_v1_forward.6} parent=47 // pred_region
        %p588 = scmp.lt.s32.totalorder %s23, 1
        %s589 = scalar_select %p588, %s23, 1
        %p590 = scmp.lt.s32.totalorder %s24, 0
        %s591 = scalar_select %p590, %s24, 0
        %s592 = smul.addr %s591, 5
        %s593 = smul.addr %s589, 5
        %s594 = sadd.s32 %s592, %s593
        %s595 = smul.addr %s594, 8
        %s596 = scalar_lea.vmem %s5, %s595
      $region56: #{netg_mlp_v1_forward.6} parent=47 // pred_fallthru
        _
    $region48: #{netg_mlp_v1_forward.6} parent=5 // pred_fallthru
      _
  $region6: #{netg_mlp_v1_forward.6} parent=0 // loop_footer
    %s16 = sadd.s32 1, %s12
  $region7: #{netg_mlp_v1_forward.6} parent=0 // loop_footer_branch
    %11 = sbr.rel target = $region3
  $region8: #{netg_mlp_v1_forward.6} parent=0 // loop_exit
    _

// kernel: netg_mlp_v1_forward.8
$region0: #{netg_mlp_v1_forward.8}
  #allocation0 [shape = 'u32[]', space=smem, size = 0x4, offset = 0x4, fixed_abs, tag = 'smem constant byte address 0x4 - core index']
  #allocation1 [shape = 'u32[144,128]{1,0:T(1,128)}', space=vmem, size = 0x12000, scoped, tag = 'internal scratch']
  %s0 = inlined_call_operand.vmem [shape: bf16[2,64,256], index: 0, kind: input, shape index: {}]
  %s1 = inlined_call_operand.vmem [shape: bf16[32,64], index: 1, kind: input, shape index: {}]
  %s2 = inlined_call_operand.vmem [shape: f32[32,1], index: 2, kind: input, shape index: {}]
  %s3 = inlined_call_operand.vmem [shape: f32[32,1], index: 3, kind: input, shape index: {}]
  %s4 = inlined_call_operand.vmem [shape: bf16[2,32,256], index: 4, kind: output, shape index: {}]
  %s5 = sld [smem:[#allocation0]]
  $region49: #{netg_mlp_v1_forward.8} parent=0
    _
  %s7 = ssub.s32 1, %s5
  %s8 = scalar_select 0, %s7, %s5
  loop: start=0, step=1, limit=4
  $region2: #{netg_mlp_v1_forward.8} parent=0 // loop_pre_header
    _
  $region3: #{netg_mlp_v1_forward.8} parent=0 // loop_header
    %s10 = sphi 0, %s14
    %p11 = scmp.ge.s32.totalorder %s10, 4
    %s17 = sphi 0, %s29
    %s18 = sphi 0, %s25
    %s19 = sphi 0, %s17
    %s20 = sphi 0, %s18
    %s21 = sphi 0, %s19
    %s22 = sphi 0, %s20
    %s34 = sphi 0, %s36
    %s37 = sphi 0, %s34
    %s38 = sphi 0, %s37
    %s54 = sphi 0, %s38
    %s58 = sphi 0, %s58
    %s60 = sphi 0, %s58
    %s61 = sphi 0, %s60
    %s75 = sphi 0, %s61
    %s79 = sphi 0, %s79
    %s81 = sphi 0, %s79
    %s82 = sphi 0, %s81
    %s96 = sphi 0, %s82
    %s100 = sphi 0, %s100
    %s102 = sphi 0, %s100
    %s103 = sphi 0, %s102
    %s117 = sphi 0, %s103
    %s125 = sphi 0, %s127
    %s128 = sphi 0, %s125
    %s129 = sphi 0, %s128
    %s145 = sphi 0, %s129
  $region4: #{netg_mlp_v1_forward.8} parent=0 // loop_header_branch
    %13 = sbr.rel (%p11) target = $region8
  $region5: #{netg_mlp_v1_forward.8} parent=0 // loop_body
    %s15 = ssub.s32 %s10, 1
    %s16 = ssub.s32 %s10, 2
    %s23 = sadd.s32 1, %s18
    %p24 = scmp.ge.s32.totalorder %s23, 1
    %s25 = scalar_select %p24, 0, %s23
    %s26 = sadd.s32 1, %s17
    %s27 = scalar_select %p24, %s26, %s17
    %p28 = scmp.ge.s32.totalorder %s27, 2
    %s29 = scalar_select %p28, 0, %s27
    %s30 = ssub.s32 %s17, %s29
    %s31 = ssub.s32 %s18, %s25
    %s32 = sor.u32 %s30, %s31
    %p33 = scmp.eq.s32.totalorder %s32, 0
    %s35 = sadd.s32 %s34, 1
    %s36 = scalar_select %p33, %s34, %s35
    %p39 = pneg %p33
    %p40 = scmp.eq.s32.totalorder %s10, 1
    %p41 = por %p39, %p40
    %p42 = scmp.ne.s32.totalorder %s34, %s37
    %p43 = scmp.eq.s32.totalorder %s10, 0
    %p44 = por %p42, %p43
    %p45 = scmp.ne.s32.totalorder %s34, %s37
    %p46 = scmp.eq.s32.totalorder %s15, 1
    %p47 = por %p45, %p46
    %p48 = scmp.ne.s32.totalorder %s37, %s38
    %p49 = scmp.eq.s32.totalorder %s15, 0
    %p50 = por %p48, %p49
    %p51 = scmp.ne.s32.totalorder %s37, %s38
    %p52 = scmp.eq.s32.totalorder %s16, 1
    %p53 = por %p51, %p52
    %p55 = scmp.ne.s32.totalorder %s38, %s54
    %p56 = scmp.eq.s32.totalorder %s16, 0
    %p57 = por %p55, %p56
    %s59 = sadd.s32 %s58, 1
    %p62 = scmp.eq.s32.totalorder %s10, 1
    %p63 = scmp.ne.s32.totalorder %s58, %s60
    %p64 = scmp.eq.s32.totalorder %s10, 0
    %p65 = por %p63, %p64
    %p66 = scmp.ne.s32.totalorder %s58, %s60
    %p67 = scmp.eq.s32.totalorder %s15, 1
    %p68 = por %p66, %p67
    %p69 = scmp.ne.s32.totalorder %s60, %s61
    %p70 = scmp.eq.s32.totalorder %s15, 0
    %p71 = por %p69, %p70
    %p72 = scmp.ne.s32.totalorder %s60, %s61
    %p73 = scmp.eq.s32.totalorder %s16, 1
    %p74 = por %p72, %p73
    %p76 = scmp.ne.s32.totalorder %s61, %s75
    %p77 = scmp.eq.s32.totalorder %s16, 0
    %p78 = por %p76, %p77
    %s80 = sadd.s32 %s79, 1
    %p83 = scmp.eq.s32.totalorder %s10, 1
    %p84 = scmp.ne.s32.totalorder %s79, %s81
    %p85 = scmp.eq.s32.totalorder %s10, 0
    %p86 = por %p84, %p85
    %p87 = scmp.ne.s32.totalorder %s79, %s81
    %p88 = scmp.eq.s32.totalorder %s15, 1
    %p89 = por %p87, %p88
    %p90 = scmp.ne.s32.totalorder %s81, %s82
    %p91 = scmp.eq.s32.totalorder %s15, 0
    %p92 = por %p90, %p91
    %p93 = scmp.ne.s32.totalorder %s81, %s82
    %p94 = scmp.eq.s32.totalorder %s16, 1
    %p95 = por %p93, %p94
    %p97 = scmp.ne.s32.totalorder %s82, %s96
    %p98 = scmp.eq.s32.totalorder %s16, 0
    %p99 = por %p97, %p98
    %s101 = sadd.s32 %s100, 1
    %p104 = scmp.eq.s32.totalorder %s10, 1
    %p105 = scmp.ne.s32.totalorder %s100, %s102
    %p106 = scmp.eq.s32.totalorder %s10, 0
    %p107 = por %p105, %p106
    %p108 = scmp.ne.s32.totalorder %s100, %s102
    %p109 = scmp.eq.s32.totalorder %s15, 1
    %p110 = por %p108, %p109
    %p111 = scmp.ne.s32.totalorder %s102, %s103
    %p112 = scmp.eq.s32.totalorder %s15, 0
    %p113 = por %p111, %p112
    %p114 = scmp.ne.s32.totalorder %s102, %s103
    %p115 = scmp.eq.s32.totalorder %s16, 1
    %p116 = por %p114, %p115
    %p118 = scmp.ne.s32.totalorder %s103, %s117
    %p119 = scmp.eq.s32.totalorder %s16, 0
    %p120 = por %p118, %p119
    %s121 = ssub.s32 %s17, %s29
    %s122 = ssub.s32 %s18, %s25
    %s123 = sor.u32 %s121, %s122
    %p124 = scmp.eq.s32.totalorder %s123, 0
    %s126 = sadd.s32 %s125, 1
    %s127 = scalar_select %p124, %s125, %s126
    %p130 = pneg %p124
    %p131 = scmp.eq.s32.totalorder %s10, 1
    %p132 = por %p130, %p131
    %p133 = scmp.ne.s32.totalorder %s125, %s128
    %p134 = scmp.eq.s32.totalorder %s10, 0
    %p135 = por %p133, %p134
    %p136 = scmp.ne.s32.totalorder %s125, %s128
    %p137 = scmp.eq.s32.totalorder %s15, 1
    %p138 = por %p136, %p137
    %p139 = scmp.ne.s32.totalorder %s128, %s129
    %p140 = scmp.eq.s32.totalorder %s15, 0
    %p141 = por %p139, %p140
    %p142 = scmp.ne.s32.totalorder %s128, %s129
    %p143 = scmp.eq.s32.totalorder %s16, 1
    %p144 = por %p142, %p143
    %p146 = scmp.ne.s32.totalorder %s129, %s145
    %p147 = scmp.eq.s32.totalorder %s16, 0
    %p148 = por %p146, %p147
    %p149 = scmp.le.s32.totalorder 1, %s10
    %p150 = scmp.lt.s32.totalorder %s10, 3
    %p151 = pnand %p149, %p150
    %p152 = pneg %p151
    // Predicated region
    $region9: #{netg_mlp_v1_forward.8} parent=5 // pred_check
      _
    $region10: #{netg_mlp_v1_forward.8} parent=5 // pred_check_branch
      %154 = sbr.rel (%p151) target = $region12
    $region11: #{netg_mlp_v1_forward.8} parent=5 // pred_region
      %s155 = ssub.s32 %s10, 1
      // Predicated region
      $region13: #{netg_mlp_v1_forward.8} parent=11 // pred_check
        %p156 = pneg %p71
      $region14: #{netg_mlp_v1_forward.8} parent=11 // pred_check_branch
        %158 = sbr.rel (%p156) target = $region16
      $region15: #{netg_mlp_v1_forward.8} parent=11 // pred_region
        _
      $region16: #{netg_mlp_v1_forward.8} parent=11 // pred_fallthru
        _
      // Predicated region
      $region17: #{netg_mlp_v1_forward.8} parent=11 // pred_check
        %p159 = pneg %p92
      $region18: #{netg_mlp_v1_forward.8} parent=11 // pred_check_branch
        %161 = sbr.rel (%p159) target = $region20
      $region19: #{netg_mlp_v1_forward.8} parent=11 // pred_region
        _
      $region20: #{netg_mlp_v1_forward.8} parent=11 // pred_fallthru
        _
      // Predicated region
      $region21: #{netg_mlp_v1_forward.8} parent=11 // pred_check
        %p162 = pneg %p113
      $region22: #{netg_mlp_v1_forward.8} parent=11 // pred_check_branch
        %164 = sbr.rel (%p162) target = $region24
      $region23: #{netg_mlp_v1_forward.8} parent=11 // pred_region
        _
      $region24: #{netg_mlp_v1_forward.8} parent=11 // pred_fallthru
        _
    $region12: #{netg_mlp_v1_forward.8} parent=5 // pred_fallthru
      _
    %p165 = scmp.lt.s32.totalorder %s10, 2
    // Predicated region
    $region25: #{netg_mlp_v1_forward.8} parent=5 // pred_check
      %p166 = pneg %p165
    $region26: #{netg_mlp_v1_forward.8} parent=5 // pred_check_branch
      %168 = sbr.rel (%p166) target = $region28
    $region27: #{netg_mlp_v1_forward.8} parent=5 // pred_region
      // Predicated region
      $region29: #{netg_mlp_v1_forward.8} parent=27 // pred_check
        %p169 = pneg %p44
      $region30: #{netg_mlp_v1_forward.8} parent=27 // pred_check_branch
        %171 = sbr.rel (%p169) target = $region32
      $region31: #{netg_mlp_v1_forward.8} parent=27 // pred_region
        %s172 = smul.u32 2, %s18
        %p173 = scmp.lt.s32.totalorder %s17, 1
        %s174 = scalar_select %p173, %s17, 1
        %p175 = scmp.lt.s32.totalorder %s172, 1
        %s176 = scalar_select %p175, %s172, 1
        %s177 = smul.addr %s174, 16
        %s178 = sadd.s32 %s176, %s177
        %s179 = smul.addr %s178, 4
        %s180 = scalar_lea.vmem %s0, %s179
        %s181 = smul.u32 2, %s18
      $region32: #{netg_mlp_v1_forward.8} parent=27 // pred_fallthru
        _
    $region28: #{netg_mlp_v1_forward.8} parent=5 // pred_fallthru
      _
    %p182 = scmp.le.s32.totalorder 1, %s10
    %p183 = scmp.lt.s32.totalorder %s10, 3
    %p184 = pnand %p182, %p183
    %p185 = pneg %p184
    // Predicated region
    $region33: #{netg_mlp_v1_forward.8} parent=5 // pred_check
      _
    $region34: #{netg_mlp_v1_forward.8} parent=5 // pred_check_branch
      %187 = sbr.rel (%p184) target = $region36
    $region35: #{netg_mlp_v1_forward.8} parent=5 // pred_region
      %s188 = ssub.s32 %s10, 1
      %s189 = smul.u32 2, %s20
      %p190 = scmp.lt.s32.totalorder %s19, 1
      %s191 = scalar_select %p190, %s19, 1
      %p192 = scmp.lt.s32.totalorder %s189, 1
      %s193 = scalar_select %p192, %s189, 1
      %s194 = smul.addr %s191, 16
      %s195 = sadd.s32 %s193, %s194
      %s196 = smul.addr %s195, 4
      %s197 = scalar_lea.vmem %s0, %s196
      %p198 = pneg %p50
      %p199 = pneg %p47
      %p200 = pneg %p71
      %p201 = pneg %p68
      %p202 = pneg %p92
      %p203 = pneg %p89
      %p204 = pneg %p113
      %p205 = pneg %p110
      %p206 = pneg %p141
      %p207 = pneg %p138
      %s208 = smul.u32 2, %s20
      %p209 = scmp.lt.s32.totalorder %s19, 1
      %s210 = scalar_select %p209, %s19, 1
      %p211 = scmp.lt.s32.totalorder %s208, 1
      %s212 = scalar_select %p211, %s208, 1
      %s213 = smul.addr %s210, 8
      %s214 = sadd.s32 %s212, %s213
      %s215 = smul.addr %s214, 4
      %s216 = scalar_lea.vmem %s4, %s215
      %s217 = smul.u32 2, %s20
      %p218 = scmp.lt.s32.totalorder %s19, 1
      %s219 = scalar_select %p218, %s19, 1
      %p220 = scmp.lt.s32.totalorder %s217, 1
      %s221 = scalar_select %p220, %s217, 1
      %s222 = smul.addr %s219, 16
      %s223 = sadd.s32 %s221, %s222
      %s224 = smul.addr %s223, 4
      %s225 = scalar_lea.vmem %s0, %s224
      %s226 = smul.u32 2, %s20
      %s227 = smul.u32 2, %s20
      %p228 = scmp.lt.s32.totalorder %s19, 1
      %s229 = scalar_select %p228, %s19, 1
      %p230 = scmp.lt.s32.totalorder %s227, 1
      %s231 = scalar_select %p230, %s227, 1
      %s232 = smul.addr %s229, 8
      %s233 = sadd.s32 %s231, %s232
      %s234 = smul.addr %s233, 4
      %s235 = scalar_lea.vmem %s4, %s234
      %s236 = smul.u32 2, %s20
      %v238 = vld [vmem:[%s225] sm:$0xff]
      %v239 = vld [vmem:[%s225 + $0x8] sm:$0xff]
      %v240 = vld [vmem:[%s225 + $0x10] sm:$0xff]
      %v241 = vld [vmem:[%s225 + $0x18] sm:$0xff]
      %v242 = vld [vmem:[%s225 + $0x20] sm:$0xff]
      %v243 = vld [vmem:[%s225 + $0x28] sm:$0xff]
      %v244 = vld [vmem:[%s225 + $0x30] sm:$0xff]
      %v245 = vld [vmem:[%s225 + $0x38] sm:$0xff]
      %v246 = vld [vmem:[%s1] sm:$0xf]
      %v247 = vld [vmem:[%s1 + $0x4] sm:$0xf]
      %v248 = vld [vmem:[%s1 + $0x8] sm:$0xf]
      %v249 = vld [vmem:[%s1 + $0xc] sm:$0xf]
      %v254 = vunpack.c.l.b16 %v246
      %v255 = vunpack.c.l.b16 %v247
      %v256 = vunpack.c.l.b16 %v248
      %v257 = vunpack.c.l.b16 %v249
      %v258 = vpack.c.b16 %v255, %v254
      %v259 = vpack.c.b16 %v257, %v256
      %v268 = vunpack.c.l.b16 %v238
      %v269 = vunpack.c.h.b16 %v238
      %v270 = vunpack.c.l.b16 %v239
      %v271 = vunpack.c.h.b16 %v239
      %v272 = vunpack.c.l.b16 %v240
      %v273 = vunpack.c.h.b16 %v240
      %v274 = vunpack.c.l.b16 %v241
      %v275 = vunpack.c.h.b16 %v241
      %v276 = vunpack.c.l.b16 %v242
      %v277 = vunpack.c.h.b16 %v242
      %v278 = vunpack.c.l.b16 %v243
      %v279 = vunpack.c.h.b16 %v243
      %v280 = vunpack.c.l.b16 %v244
      %v281 = vunpack.c.h.b16 %v244
      %v282 = vunpack.c.l.b16 %v245
      %v283 = vunpack.c.h.b16 %v245
      %v284 = vpack.c.b16 %v270, %v268
      %v285 = vpack.c.b16 %v271, %v269
      %v286 = vpack.c.b16 %v274, %v272
      %v287 = vpack.c.b16 %v275, %v273
      %v288 = vpack.c.b16 %v278, %v276
      %v289 = vpack.c.b16 %v279, %v277
      %v290 = vpack.c.b16 %v282, %v280
      %v291 = vpack.c.b16 %v283, %v281
      %vm300 = vcmask 523264
      %v302 = vsel %vm300, %v258, 0
      %v305 = vsel %vm300, %v259, 0
      %307 = vmatprep.subr.bf16.mxu0 %v285
      %308 = vmatpush1.bf16.msra.mxu0 %v284
      %309 = vmatprep.subr.bf16.mxu0 %v287
      %310 = vmatpush1.bf16.msra.mxu0 %v286
      %311 = vmatprep.subr.bf16.mxu0 %v289
      %312 = vmatpush1.bf16.msra.mxu0 %v288
      %313 = vmatprep.subr.bf16.mxu0 %v291
      %314 = vmatpush1.bf16.msra.mxu0 %v290
      %315 = vmatprep.subr.bf16.mxu0 0
      %316 = vmatpush1.bf16.msra.mxu0 0
      %317 = vmatprep.subr.bf16.mxu0 0
      %318 = vmatpush1.bf16.msra.mxu0 0
      %319 = vmatprep.subr.bf16.mxu0 0
      %320 = vmatpush1.bf16.msra.mxu0 0
      %321 = vmatprep.subr.bf16.mxu0 0
      %322 = vmatpush1.bf16.msra.mxu0 0
      %323 = vmatprep.subr.bf16.mxu0 0
      %324 = vmatpush1.bf16.msra.mxu0 0
      %325 = vmatprep.subr.bf16.mxu0 0
      %326 = vmatpush1.bf16.msra.mxu0 0
      %327 = vmatprep.subr.bf16.mxu0 0
      %328 = vmatpush1.bf16.msra.mxu0 0
      %329 = vmatprep.subr.bf16.mxu0 0
      %330 = vmatpush1.bf16.msra.mxu0 0
      %331 = vmatprep.subr.bf16.mxu0 0
      %332 = vmatpush1.bf16.msra.mxu0 0
      %333 = vmatprep.subr.bf16.mxu0 0
      %334 = vmatpush1.bf16.msra.mxu0 0
      %335 = vmatprep.subr.bf16.mxu0 0
      %336 = vmatpush1.bf16.msra.mxu0 0
      %337 = vmatprep.subr.bf16.mxu0 0
      %338 = vmatpush1.bf16.msra.mxu0 0
      %339 = vmatprep.mubr.bf16.mxu0 0
      %340 = vmatmul.mubr.bf16.gmra.mrb[0].mxu0 %v302
      %v341 = vpop.f32.mrb[0].mxu0
      %v342 = vadd.f32 0.0, %v341
      %v343 = vpop.f32.mrb[0].mxu0
      %v344 = vadd.f32 0.0, %v343
      %v345 = vpop.f32.mrb[0].mxu0
      %v346 = vadd.f32 0.0, %v345
      %v347 = vpop.f32.mrb[0].mxu0
      %v348 = vadd.f32 0.0, %v347
      %349 = vmatprep.mubr.bf16.mxu0 0
      %350 = vmatmul.mubr.bf16.gmra.mrb[0].mxu0 %v305
      %v351 = vpop.f32.mrb[0].mxu0
      %v352 = vadd.f32 0.0, %v351
      %v353 = vpop.f32.mrb[0].mxu0
      %v354 = vadd.f32 0.0, %v353
      %v355 = vpop.f32.mrb[0].mxu0
      %v356 = vadd.f32 0.0, %v355
      %v357 = vpop.f32.mrb[0].mxu0
      %v358 = vadd.f32 0.0, %v357
      %359 = vdwg.mxu0
      %v360 = vld [vmem:[%s2] sm:$0xff]
      %v361 = vld [vmem:[%s2 + $0x8] sm:$0xff]
      %v362 = vld [vmem:[%s2 + $0x10] sm:$0xff]
      %v363 = vld [vmem:[%s2 + $0x18] sm:$0xff]
      %365 = vset.pattern.permute.xlu0 0
      %366 = vperm.xlu0 %365, %v360
      %v367 = vpop.permute.xlu0 %366
      %370 = vset.pattern.permute.xlu0 0
      %371 = vperm.xlu0 %370, %v361
      %v372 = vpop.permute.xlu0 %371
      %375 = vset.pattern.permute.xlu0 0
      %376 = vperm.xlu0 %375, %v362
      %v377 = vpop.permute.xlu0 %376
      %380 = vset.pattern.permute.xlu0 0
      %381 = vperm.xlu0 %380, %v363
      %v382 = vpop.permute.xlu0 %381
      %v384 = vmul.f32 %v342, %v367
      %v385 = vmul.f32 %v344, %v367
      %v386 = vmul.f32 %v346, %v372
      %v387 = vmul.f32 %v348, %v372
      %v388 = vmul.f32 %v352, %v377
      %v389 = vmul.f32 %v354, %v377
      %v390 = vmul.f32 %v356, %v382
      %v391 = vmul.f32 %v358, %v382
      %v392 = vld [vmem:[%s3] sm:$0xff]
      %v393 = vld [vmem:[%s3 + $0x8] sm:$0xff]
      %v394 = vld [vmem:[%s3 + $0x10] sm:$0xff]
      %v395 = vld [vmem:[%s3 + $0x18] sm:$0xff]
      %397 = vset.pattern.permute.xlu0 0
      %398 = vperm.xlu0 %397, %v392
      %v399 = vpop.permute.xlu0 %398
      %402 = vset.pattern.permute.xlu0 0
      %403 = vperm.xlu0 %402, %v393
      %v404 = vpop.permute.xlu0 %403
      %407 = vset.pattern.permute.xlu0 0
      %408 = vperm.xlu0 %407, %v394
      %v409 = vpop.permute.xlu0 %408
      %412 = vset.pattern.permute.xlu0 0
      %413 = vperm.xlu0 %412, %v395
      %v414 = vpop.permute.xlu0 %413
      %v416 = vadd.f32 %v384, %v399
      %v417 = vadd.f32 %v385, %v399
      %v418 = vadd.f32 %v386, %v404
      %v419 = vadd.f32 %v387, %v404
      %v420 = vadd.f32 %v388, %v409
      %v421 = vadd.f32 %v389, %v409
      %v422 = vadd.f32 %v390, %v414
      %v423 = vadd.f32 %v391, %v414
      %v424 = vmax.f32 %v416, 0.0
      %v425 = vmax.f32 %v417, 0.0
      %v426 = vmax.f32 %v418, 0.0
      %v427 = vmax.f32 %v419, 0.0
      %v428 = vmax.f32 %v420, 0.0
      %v429 = vmax.f32 %v421, 0.0
      %v430 = vmax.f32 %v422, 0.0
      %v431 = vmax.f32 %v423, 0.0
      %v432 = vpack.c.bf16 %v426, %v424
      %v433 = vpack.c.bf16 %v427, %v425
      %v434 = vpack.c.bf16 %v430, %v428
      %v435 = vpack.c.bf16 %v431, %v429
      %v440 = vunpack.c.l.b16 %v432
      %v441 = vunpack.c.l.b16 %v433
      %v442 = vunpack.c.h.b16 %v432
      %v443 = vunpack.c.h.b16 %v433
      %v444 = vunpack.c.l.b16 %v434
      %v445 = vunpack.c.l.b16 %v435
      %v446 = vunpack.c.h.b16 %v434
      %v447 = vunpack.c.h.b16 %v435
      %v448 = vpack.c.b16 %v441, %v440
      %v449 = vpack.c.b16 %v443, %v442
      %v450 = vpack.c.b16 %v445, %v444
      %v451 = vpack.c.b16 %v447, %v446
      %456 = vst [vmem:[%s235] sm:$0xff] %v448
      %457 = vst [vmem:[%s235 + $0x8] sm:$0xff] %v449
      %458 = vst [vmem:[%s235 + $0x10] sm:$0xff] %v450
      %459 = vst [vmem:[%s235 + $0x18] sm:$0xff] %v451
      %s460 = smul.u32 2, %s20
      %p461 = scmp.lt.s32.totalorder %s19, 1
      %s462 = scalar_select %p461, %s19, 1
      %p463 = scmp.lt.s32.totalorder %s460, 1
      %s464 = scalar_select %p463, %s460, 1
      %s465 = smul.addr %s462, 8
      %s466 = sadd.s32 %s464, %s465
      %s467 = smul.addr %s466, 4
      %s468 = scalar_lea.vmem %s4, %s467
      // Predicated region
      $region37: #{netg_mlp_v1_forward.8} parent=35 // pred_check
        %p469 = pneg %p138
      $region38: #{netg_mlp_v1_forward.8} parent=35 // pred_check_branch
        %471 = sbr.rel (%p469) target = $region40
      $region39: #{netg_mlp_v1_forward.8} parent=35 // pred_region
        %s472 = smul.u32 2, %s20
      $region40: #{netg_mlp_v1_forward.8} parent=35 // pred_fallthru
        _
    $region36: #{netg_mlp_v1_forward.8} parent=5 // pred_fallthru
      _
    %p473 = scmp.le.s32.totalorder 2, %s10
    // Predicated region
    $region41: #{netg_mlp_v1_forward.8} parent=5 // pred_check
      %p474 = pneg %p473
    $region42: #{netg_mlp_v1_forward.8} parent=5 // pred_check_branch
      %476 = sbr.rel (%p474) target = $region44
    $region43: #{netg_mlp_v1_forward.8} parent=5 // pred_region
      %s477 = ssub.s32 %s10, 2
      // Predicated region
      $region45: #{netg_mlp_v1_forward.8} parent=43 // pred_check
        %p478 = pneg %p144
      $region46: #{netg_mlp_v1_forward.8} parent=43 // pred_check_branch
        %480 = sbr.rel (%p478) target = $region48
      $region47: #{netg_mlp_v1_forward.8} parent=43 // pred_region
        %s481 = smul.u32 2, %s22
        %p482 = scmp.lt.s32.totalorder %s21, 1
        %s483 = scalar_select %p482, %s21, 1
        %p484 = scmp.lt.s32.totalorder %s481, 1
        %s485 = scalar_select %p484, %s481, 1
        %s486 = smul.addr %s483, 8
        %s487 = sadd.s32 %s485, %s486
        %s488 = smul.addr %s487, 4
        %s489 = scalar_lea.vmem %s4, %s488
      $region48: #{netg_mlp_v1_forward.8} parent=43 // pred_fallthru
        _
    $region44: #{netg_mlp_v1_forward.8} parent=5 // pred_fallthru
      _
  $region6: #{netg_mlp_v1_forward.8} parent=0 // loop_footer
    %s14 = sadd.s32 1, %s10
  $region7: #{netg_mlp_v1_forward.8} parent=0 // loop_footer_branch
    %9 = sbr.rel target = $region3
  $region8: #{netg_mlp_v1_forward.8} parent=0 // loop_exit
    _

// kernel: netg_mlp_v1_forward.7
$region0: #{netg_mlp_v1_forward.7}
  #allocation0 [shape = 'u32[]', space=smem, size = 0x4, offset = 0x4, fixed_abs, tag = 'smem constant byte address 0x4 - core index']
  #allocation1 [shape = 'u32[144,128]{1,0:T(1,128)}', space=vmem, size = 0x12000, scoped, tag = 'internal scratch']
  %s0 = inlined_call_operand.vmem [shape: bf16[2,32,256], index: 0, kind: input, shape index: {}]
  %s1 = inlined_call_operand.vmem [shape: bf16[64,32], index: 1, kind: input, shape index: {}]
  %s2 = inlined_call_operand.vmem [shape: f32[64,1], index: 2, kind: input, shape index: {}]
  %s3 = inlined_call_operand.vmem [shape: f32[64,1], index: 3, kind: input, shape index: {}]
  %s4 = inlined_call_operand.vmem [shape: bf16[2,64,256], index: 4, kind: output, shape index: {0}]
  %s5 = inlined_call_operand.vmem [shape: f32[2,1,65,65], index: 5, kind: output, shape index: {1}]
  %6 = xla_tuple %s4, %s5
  %s7 = sld [smem:[#allocation0]]
  $region57: #{netg_mlp_v1_forward.7} parent=0
    _
  %s9 = ssub.s32 1, %s7
  %s10 = scalar_select 0, %s9, %s7
  loop: start=0, step=1, limit=4
  $region2: #{netg_mlp_v1_forward.7} parent=0 // loop_pre_header
    _
  $region3: #{netg_mlp_v1_forward.7} parent=0 // loop_header
    %s12 = sphi 0, %s16
    %p13 = scmp.ge.s32.totalorder %s12, 4
    %s19 = sphi 0, %s31
    %s20 = sphi 0, %s27
    %s21 = sphi 0, %s19
    %s22 = sphi 0, %s20
    %s23 = sphi 0, %s21
    %s24 = sphi 0, %s22
    %s36 = sphi 0, %s38
    %s39 = sphi 0, %s36
    %s40 = sphi 0, %s39
    %s56 = sphi 0, %s40
    %s60 = sphi 0, %s60
    %s62 = sphi 0, %s60
    %s63 = sphi 0, %s62
    %s77 = sphi 0, %s63
    %s81 = sphi 0, %s81
    %s83 = sphi 0, %s81
    %s84 = sphi 0, %s83
    %s98 = sphi 0, %s84
    %s102 = sphi 0, %s102
    %s104 = sphi 0, %s102
    %s105 = sphi 0, %s104
    %s119 = sphi 0, %s105
    %s127 = sphi 0, %s129
    %s130 = sphi 0, %s127
    %s131 = sphi 0, %s130
    %s147 = sphi 0, %s131
    %s155 = sphi 0, %s157
    %s158 = sphi 0, %s155
    %s159 = sphi 0, %s158
    %s175 = sphi 0, %s159
  $region4: #{netg_mlp_v1_forward.7} parent=0 // loop_header_branch
    %15 = sbr.rel (%p13) target = $region8
  $region5: #{netg_mlp_v1_forward.7} parent=0 // loop_body
    %s17 = ssub.s32 %s12, 1
    %s18 = ssub.s32 %s12, 2
    %s25 = sadd.s32 1, %s20
    %p26 = scmp.ge.s32.totalorder %s25, 1
    %s27 = scalar_select %p26, 0, %s25
    %s28 = sadd.s32 1, %s19
    %s29 = scalar_select %p26, %s28, %s19
    %p30 = scmp.ge.s32.totalorder %s29, 2
    %s31 = scalar_select %p30, 0, %s29
    %s32 = ssub.s32 %s19, %s31
    %s33 = ssub.s32 %s20, %s27
    %s34 = sor.u32 %s32, %s33
    %p35 = scmp.eq.s32.totalorder %s34, 0
    %s37 = sadd.s32 %s36, 1
    %s38 = scalar_select %p35, %s36, %s37
    %p41 = pneg %p35
    %p42 = scmp.eq.s32.totalorder %s12, 1
    %p43 = por %p41, %p42
    %p44 = scmp.ne.s32.totalorder %s36, %s39
    %p45 = scmp.eq.s32.totalorder %s12, 0
    %p46 = por %p44, %p45
    %p47 = scmp.ne.s32.totalorder %s36, %s39
    %p48 = scmp.eq.s32.totalorder %s17, 1
    %p49 = por %p47, %p48
    %p50 = scmp.ne.s32.totalorder %s39, %s40
    %p51 = scmp.eq.s32.totalorder %s17, 0
    %p52 = por %p50, %p51
    %p53 = scmp.ne.s32.totalorder %s39, %s40
    %p54 = scmp.eq.s32.totalorder %s18, 1
    %p55 = por %p53, %p54
    %p57 = scmp.ne.s32.totalorder %s40, %s56
    %p58 = scmp.eq.s32.totalorder %s18, 0
    %p59 = por %p57, %p58
    %s61 = sadd.s32 %s60, 1
    %p64 = scmp.eq.s32.totalorder %s12, 1
    %p65 = scmp.ne.s32.totalorder %s60, %s62
    %p66 = scmp.eq.s32.totalorder %s12, 0
    %p67 = por %p65, %p66
    %p68 = scmp.ne.s32.totalorder %s60, %s62
    %p69 = scmp.eq.s32.totalorder %s17, 1
    %p70 = por %p68, %p69
    %p71 = scmp.ne.s32.totalorder %s62, %s63
    %p72 = scmp.eq.s32.totalorder %s17, 0
    %p73 = por %p71, %p72
    %p74 = scmp.ne.s32.totalorder %s62, %s63
    %p75 = scmp.eq.s32.totalorder %s18, 1
    %p76 = por %p74, %p75
    %p78 = scmp.ne.s32.totalorder %s63, %s77
    %p79 = scmp.eq.s32.totalorder %s18, 0
    %p80 = por %p78, %p79
    %s82 = sadd.s32 %s81, 1
    %p85 = scmp.eq.s32.totalorder %s12, 1
    %p86 = scmp.ne.s32.totalorder %s81, %s83
    %p87 = scmp.eq.s32.totalorder %s12, 0
    %p88 = por %p86, %p87
    %p89 = scmp.ne.s32.totalorder %s81, %s83
    %p90 = scmp.eq.s32.totalorder %s17, 1
    %p91 = por %p89, %p90
    %p92 = scmp.ne.s32.totalorder %s83, %s84
    %p93 = scmp.eq.s32.totalorder %s17, 0
    %p94 = por %p92, %p93
    %p95 = scmp.ne.s32.totalorder %s83, %s84
    %p96 = scmp.eq.s32.totalorder %s18, 1
    %p97 = por %p95, %p96
    %p99 = scmp.ne.s32.totalorder %s84, %s98
    %p100 = scmp.eq.s32.totalorder %s18, 0
    %p101 = por %p99, %p100
    %s103 = sadd.s32 %s102, 1
    %p106 = scmp.eq.s32.totalorder %s12, 1
    %p107 = scmp.ne.s32.totalorder %s102, %s104
    %p108 = scmp.eq.s32.totalorder %s12, 0
    %p109 = por %p107, %p108
    %p110 = scmp.ne.s32.totalorder %s102, %s104
    %p111 = scmp.eq.s32.totalorder %s17, 1
    %p112 = por %p110, %p111
    %p113 = scmp.ne.s32.totalorder %s104, %s105
    %p114 = scmp.eq.s32.totalorder %s17, 0
    %p115 = por %p113, %p114
    %p116 = scmp.ne.s32.totalorder %s104, %s105
    %p117 = scmp.eq.s32.totalorder %s18, 1
    %p118 = por %p116, %p117
    %p120 = scmp.ne.s32.totalorder %s105, %s119
    %p121 = scmp.eq.s32.totalorder %s18, 0
    %p122 = por %p120, %p121
    %s123 = ssub.s32 %s19, %s31
    %s124 = ssub.s32 %s20, %s27
    %s125 = sor.u32 %s123, %s124
    %p126 = scmp.eq.s32.totalorder %s125, 0
    %s128 = sadd.s32 %s127, 1
    %s129 = scalar_select %p126, %s127, %s128
    %p132 = pneg %p126
    %p133 = scmp.eq.s32.totalorder %s12, 1
    %p134 = por %p132, %p133
    %p135 = scmp.ne.s32.totalorder %s127, %s130
    %p136 = scmp.eq.s32.totalorder %s12, 0
    %p137 = por %p135, %p136
    %p138 = scmp.ne.s32.totalorder %s127, %s130
    %p139 = scmp.eq.s32.totalorder %s17, 1
    %p140 = por %p138, %p139
    %p141 = scmp.ne.s32.totalorder %s130, %s131
    %p142 = scmp.eq.s32.totalorder %s17, 0
    %p143 = por %p141, %p142
    %p144 = scmp.ne.s32.totalorder %s130, %s131
    %p145 = scmp.eq.s32.totalorder %s18, 1
    %p146 = por %p144, %p145
    %p148 = scmp.ne.s32.totalorder %s131, %s147
    %p149 = scmp.eq.s32.totalorder %s18, 0
    %p150 = por %p148, %p149
    %s151 = ssub.s32 %s19, %s31
    %s152 = ssub.s32 %s20, %s27
    %s153 = sor.u32 %s151, %s152
    %p154 = scmp.eq.s32.totalorder %s153, 0
    %s156 = sadd.s32 %s155, 1
    %s157 = scalar_select %p154, %s155, %s156
    %p160 = pneg %p154
    %p161 = scmp.eq.s32.totalorder %s12, 1
    %p162 = por %p160, %p161
    %p163 = scmp.ne.s32.totalorder %s155, %s158
    %p164 = scmp.eq.s32.totalorder %s12, 0
    %p165 = por %p163, %p164
    %p166 = scmp.ne.s32.totalorder %s155, %s158
    %p167 = scmp.eq.s32.totalorder %s17, 1
    %p168 = por %p166, %p167
    %p169 = scmp.ne.s32.totalorder %s158, %s159
    %p170 = scmp.eq.s32.totalorder %s17, 0
    %p171 = por %p169, %p170
    %p172 = scmp.ne.s32.totalorder %s158, %s159
    %p173 = scmp.eq.s32.totalorder %s18, 1
    %p174 = por %p172, %p173
    %p176 = scmp.ne.s32.totalorder %s159, %s175
    %p177 = scmp.eq.s32.totalorder %s18, 0
    %p178 = por %p176, %p177
    %p179 = scmp.le.s32.totalorder 1, %s12
    %p180 = scmp.lt.s32.totalorder %s12, 3
    %p181 = pnand %p179, %p180
    %p182 = pneg %p181
    // Predicated region
    $region9: #{netg_mlp_v1_forward.7} parent=5 // pred_check
      _
    $region10: #{netg_mlp_v1_forward.7} parent=5 // pred_check_branch
      %184 = sbr.rel (%p181) target = $region12
    $region11: #{netg_mlp_v1_forward.7} parent=5 // pred_region
      %s185 = ssub.s32 %s12, 1
      // Predicated region
      $region13: #{netg_mlp_v1_forward.7} parent=11 // pred_check
        %p186 = pneg %p73
      $region14: #{netg_mlp_v1_forward.7} parent=11 // pred_check_branch
        %188 = sbr.rel (%p186) target = $region16
      $region15: #{netg_mlp_v1_forward.7} parent=11 // pred_region
        _
      $region16: #{netg_mlp_v1_forward.7} parent=11 // pred_fallthru
        _
      // Predicated region
      $region17: #{netg_mlp_v1_forward.7} parent=11 // pred_check
        %p189 = pneg %p94
      $region18: #{netg_mlp_v1_forward.7} parent=11 // pred_check_branch
        %191 = sbr.rel (%p189) target = $region20
      $region19: #{netg_mlp_v1_forward.7} parent=11 // pred_region
        _
      $region20: #{netg_mlp_v1_forward.7} parent=11 // pred_fallthru
        _
      // Predicated region
      $region21: #{netg_mlp_v1_forward.7} parent=11 // pred_check
        %p192 = pneg %p115
      $region22: #{netg_mlp_v1_forward.7} parent=11 // pred_check_branch
        %194 = sbr.rel (%p192) target = $region24
      $region23: #{netg_mlp_v1_forward.7} parent=11 // pred_region
        _
      $region24: #{netg_mlp_v1_forward.7} parent=11 // pred_fallthru
        _
    $region12: #{netg_mlp_v1_forward.7} parent=5 // pred_fallthru
      _
    %p195 = scmp.lt.s32.totalorder %s12, 2
    // Predicated region
    $region25: #{netg_mlp_v1_forward.7} parent=5 // pred_check
      %p196 = pneg %p195
    $region26: #{netg_mlp_v1_forward.7} parent=5 // pred_check_branch
      %198 = sbr.rel (%p196) target = $region28
    $region27: #{netg_mlp_v1_forward.7} parent=5 // pred_region
      // Predicated region
      $region29: #{netg_mlp_v1_forward.7} parent=27 // pred_check
        %p199 = pneg %p46
      $region30: #{netg_mlp_v1_forward.7} parent=27 // pred_check_branch
        %201 = sbr.rel (%p199) target = $region32
      $region31: #{netg_mlp_v1_forward.7} parent=27 // pred_region
        %s202 = smul.u32 2, %s20
        %p203 = scmp.lt.s32.totalorder %s19, 1
        %s204 = scalar_select %p203, %s19, 1
        %p205 = scmp.lt.s32.totalorder %s202, 1
        %s206 = scalar_select %p205, %s202, 1
        %s207 = smul.addr %s204, 8
        %s208 = sadd.s32 %s206, %s207
        %s209 = smul.addr %s208, 4
        %s210 = scalar_lea.vmem %s0, %s209
        %s211 = smul.u32 2, %s20
      $region32: #{netg_mlp_v1_forward.7} parent=27 // pred_fallthru
        _
    $region28: #{netg_mlp_v1_forward.7} parent=5 // pred_fallthru
      _
    %p212 = scmp.le.s32.totalorder 1, %s12
    %p213 = scmp.lt.s32.totalorder %s12, 3
    %p214 = pnand %p212, %p213
    %p215 = pneg %p214
    // Predicated region
    $region33: #{netg_mlp_v1_forward.7} parent=5 // pred_check
      _
    $region34: #{netg_mlp_v1_forward.7} parent=5 // pred_check_branch
      %217 = sbr.rel (%p214) target = $region36
    $region35: #{netg_mlp_v1_forward.7} parent=5 // pred_region
      %s218 = ssub.s32 %s12, 1
      %s219 = smul.u32 2, %s22
      %p220 = scmp.lt.s32.totalorder %s21, 1
      %s221 = scalar_select %p220, %s21, 1
      %p222 = scmp.lt.s32.totalorder %s219, 1
      %s223 = scalar_select %p222, %s219, 1
      %s224 = smul.addr %s221, 8
      %s225 = sadd.s32 %s223, %s224
      %s226 = smul.addr %s225, 4
      %s227 = scalar_lea.vmem %s0, %s226
      %p228 = pneg %p52
      %p229 = pneg %p49
      %p230 = pneg %p73
      %p231 = pneg %p70
      %p232 = pneg %p94
      %p233 = pneg %p91
      %p234 = pneg %p115
      %p235 = pneg %p112
      %p236 = pneg %p143
      %p237 = pneg %p140
      %s238 = smul.u32 2, %s22
      %p239 = scmp.lt.s32.totalorder %s21, 1
      %s240 = scalar_select %p239, %s21, 1
      %p241 = scmp.lt.s32.totalorder %s238, 1
      %s242 = scalar_select %p241, %s238, 1
      %s243 = smul.addr %s240, 16
      %s244 = sadd.s32 %s242, %s243
      %s245 = smul.addr %s244, 4
      %s246 = scalar_lea.vmem %s4, %s245
      %p247 = pneg %p171
      %p248 = pneg %p168
      %p249 = scmp.lt.s32.totalorder %s21, 1
      %s250 = scalar_select %p249, %s21, 1
      %p251 = scmp.lt.s32.totalorder %s22, 0
      %s252 = scalar_select %p251, %s22, 0
      %s253 = smul.addr %s252, 9
      %s254 = smul.addr %s250, 9
      %s255 = sadd.s32 %s253, %s254
      %s256 = smul.addr %s255, 8
      %s257 = scalar_lea.vmem %s5, %s256
      %s258 = smul.u32 2, %s22
      %p259 = scmp.lt.s32.totalorder %s21, 1
      %s260 = scalar_select %p259, %s21, 1
      %p261 = scmp.lt.s32.totalorder %s258, 1
      %s262 = scalar_select %p261, %s258, 1
      %s263 = smul.addr %s260, 8
      %s264 = sadd.s32 %s262, %s263
      %s265 = smul.addr %s264, 4
      %s266 = scalar_lea.vmem %s0, %s265
      %s267 = smul.u32 2, %s22
      %s268 = smul.u32 2, %s22
      %p269 = scmp.lt.s32.totalorder %s21, 1
      %s270 = scalar_select %p269, %s21, 1
      %p271 = scmp.lt.s32.totalorder %s268, 1
      %s272 = scalar_select %p271, %s268, 1
      %s273 = smul.addr %s270, 16
      %s274 = sadd.s32 %s272, %s273
      %s275 = smul.addr %s274, 4
      %s276 = scalar_lea.vmem %s4, %s275
      %s277 = smul.u32 2, %s22
      %p278 = scmp.lt.s32.totalorder %s21, 1
      %s279 = scalar_select %p278, %s21, 1
      %p280 = scmp.lt.s32.totalorder %s22, 0
      %s281 = scalar_select %p280, %s22, 0
      %s282 = smul.addr %s281, 9
      %s283 = smul.addr %s279, 9
      %s284 = sadd.s32 %s282, %s283
      %s285 = smul.addr %s284, 8
      %s286 = scalar_lea.vmem %s5, %s285
      %v289 = vld [vmem:[%s266] sm:$0xff]
      %v290 = vld [vmem:[%s266 + $0x8] sm:$0xff]
      %v291 = vld [vmem:[%s266 + $0x10] sm:$0xff]
      %v292 = vld [vmem:[%s266 + $0x18] sm:$0xff]
      %v293 = vld [vmem:[%s1] sm:$0xf]
      %v294 = vld [vmem:[%s1 + $0x4] sm:$0xf]
      %v295 = vld [vmem:[%s1 + $0x8] sm:$0xf]
      %v296 = vld [vmem:[%s1 + $0xc] sm:$0xf]
      %v297 = vld [vmem:[%s1 + $0x10] sm:$0xf]
      %v298 = vld [vmem:[%s1 + $0x14] sm:$0xf]
      %v299 = vld [vmem:[%s1 + $0x18] sm:$0xf]
      %v300 = vld [vmem:[%s1 + $0x1c] sm:$0xf]
      %v309 = vunpack.c.l.b16 %v293
      %v310 = vunpack.c.l.b16 %v294
      %v311 = vunpack.c.l.b16 %v295
      %v312 = vunpack.c.l.b16 %v296
      %v313 = vunpack.c.l.b16 %v297
      %v314 = vunpack.c.l.b16 %v298
      %v315 = vunpack.c.l.b16 %v299
      %v316 = vunpack.c.l.b16 %v300
      %v317 = vpack.c.b16 %v310, %v309
      %v318 = vpack.c.b16 %v312, %v311
      %v319 = vpack.c.b16 %v314, %v313
      %v320 = vpack.c.b16 %v316, %v315
      %v325 = vunpack.c.l.b16 %v289
      %v326 = vunpack.c.h.b16 %v289
      %v327 = vunpack.c.l.b16 %v290
      %v328 = vunpack.c.h.b16 %v290
      %v329 = vunpack.c.l.b16 %v291
      %v330 = vunpack.c.h.b16 %v291
      %v331 = vunpack.c.l.b16 %v292
      %v332 = vunpack.c.h.b16 %v292
      %v333 = vpack.c.b16 %v327, %v325
      %v334 = vpack.c.b16 %v328, %v326
      %v335 = vpack.c.b16 %v331, %v329
      %v336 = vpack.c.b16 %v332, %v330
      %vm341 = vcmask 261120
      %v343 = vsel %vm341, %v317, 0
      %v346 = vsel %vm341, %v318, 0
      %v349 = vsel %vm341, %v319, 0
      %v352 = vsel %vm341, %v320, 0
      %354 = vmatprep.subr.bf16.mxu0 %v334
      %355 = vmatpush1.bf16.msra.mxu0 %v333
      %356 = vmatprep.subr.bf16.mxu0 %v336
      %357 = vmatpush1.bf16.msra.mxu0 %v335
      %358 = vmatprep.subr.bf16.mxu0 0
      %359 = vmatpush1.bf16.msra.mxu0 0
      %360 = vmatprep.subr.bf16.mxu0 0
      %361 = vmatpush1.bf16.msra.mxu0 0
      %362 = vmatprep.subr.bf16.mxu0 0
      %363 = vmatpush1.bf16.msra.mxu0 0
      %364 = vmatprep.subr.bf16.mxu0 0
      %365 = vmatpush1.bf16.msra.mxu0 0
      %366 = vmatprep.subr.bf16.mxu0 0
      %367 = vmatpush1.bf16.msra.mxu0 0
      %368 = vmatprep.subr.bf16.mxu0 0
      %369 = vmatpush1.bf16.msra.mxu0 0
      %370 = vmatprep.subr.bf16.mxu0 0
      %371 = vmatpush1.bf16.msra.mxu0 0
      %372 = vmatprep.subr.bf16.mxu0 0
      %373 = vmatpush1.bf16.msra.mxu0 0
      %374 = vmatprep.subr.bf16.mxu0 0
      %375 = vmatpush1.bf16.msra.mxu0 0
      %376 = vmatprep.subr.bf16.mxu0 0
      %377 = vmatpush1.bf16.msra.mxu0 0
      %378 = vmatprep.subr.bf16.mxu0 0
      %379 = vmatpush1.bf16.msra.mxu0 0
      %380 = vmatprep.subr.bf16.mxu0 0
      %381 = vmatpush1.bf16.msra.mxu0 0
      %382 = vmatprep.subr.bf16.mxu0 0
      %383 = vmatpush1.bf16.msra.mxu0 0
      %384 = vmatprep.subr.bf16.mxu0 0
      %385 = vmatpush1.bf16.msra.mxu0 0
      %386 = vmatprep.mubr.bf16.mxu0 0
      %387 = vmatmul.mubr.bf16.gmra.mrb[0].mxu0 %v343
      %v388 = vpop.f32.mrb[0].mxu0
      %v389 = vadd.f32 0.0, %v388
      %v390 = vpop.f32.mrb[0].mxu0
      %v391 = vadd.f32 0.0, %v390
      %v392 = vpop.f32.mrb[0].mxu0
      %v393 = vadd.f32 0.0, %v392
      %v394 = vpop.f32.mrb[0].mxu0
      %v395 = vadd.f32 0.0, %v394
      %396 = vmatprep.mubr.bf16.mxu0 0
      %397 = vmatmul.mubr.bf16.gmra.mrb[0].mxu0 %v346
      %v398 = vpop.f32.mrb[0].mxu0
      %v399 = vadd.f32 0.0, %v398
      %v400 = vpop.f32.mrb[0].mxu0
      %v401 = vadd.f32 0.0, %v400
      %v402 = vpop.f32.mrb[0].mxu0
      %v403 = vadd.f32 0.0, %v402
      %v404 = vpop.f32.mrb[0].mxu0
      %v405 = vadd.f32 0.0, %v404
      %406 = vmatprep.mubr.bf16.mxu0 0
      %407 = vmatmul.mubr.bf16.gmra.mrb[0].mxu0 %v349
      %v408 = vpop.f32.mrb[0].mxu0
      %v409 = vadd.f32 0.0, %v408
      %v410 = vpop.f32.mrb[0].mxu0
      %v411 = vadd.f32 0.0, %v410
      %v412 = vpop.f32.mrb[0].mxu0
      %v413 = vadd.f32 0.0, %v412
      %v414 = vpop.f32.mrb[0].mxu0
      %v415 = vadd.f32 0.0, %v414
      %416 = vmatprep.mubr.bf16.mxu0 0
      %417 = vmatmul.mubr.bf16.gmra.mrb[0].mxu0 %v352
      %v418 = vpop.f32.mrb[0].mxu0
      %v419 = vadd.f32 0.0, %v418
      %v420 = vpop.f32.mrb[0].mxu0
      %v421 = vadd.f32 0.0, %v420
      %v422 = vpop.f32.mrb[0].mxu0
      %v423 = vadd.f32 0.0, %v422
      %v424 = vpop.f32.mrb[0].mxu0
      %v425 = vadd.f32 0.0, %v424
      %426 = vdwg.mxu0
      %v427 = vld [vmem:[%s2] sm:$0xff]
      %v428 = vld [vmem:[%s2 + $0x8] sm:$0xff]
      %v429 = vld [vmem:[%s2 + $0x10] sm:$0xff]
      %v430 = vld [vmem:[%s2 + $0x18] sm:$0xff]
      %v431 = vld [vmem:[%s2 + $0x20] sm:$0xff]
      %v432 = vld [vmem:[%s2 + $0x28] sm:$0xff]
      %v433 = vld [vmem:[%s2 + $0x30] sm:$0xff]
      %v434 = vld [vmem:[%s2 + $0x38] sm:$0xff]
      %436 = vset.pattern.permute.xlu0 0
      %437 = vperm.xlu0 %436, %v427
      %v438 = vpop.permute.xlu0 %437
      %441 = vset.pattern.permute.xlu0 0
      %442 = vperm.xlu0 %441, %v428
      %v443 = vpop.permute.xlu0 %442
      %446 = vset.pattern.permute.xlu0 0
      %447 = vperm.xlu0 %446, %v429
      %v448 = vpop.permute.xlu0 %447
      %451 = vset.pattern.permute.xlu0 0
      %452 = vperm.xlu0 %451, %v430
      %v453 = vpop.permute.xlu0 %452
      %456 = vset.pattern.permute.xlu0 0
      %457 = vperm.xlu0 %456, %v431
      %v458 = vpop.permute.xlu0 %457
      %461 = vset.pattern.permute.xlu0 0
      %462 = vperm.xlu0 %461, %v432
      %v463 = vpop.permute.xlu0 %462
      %466 = vset.pattern.permute.xlu0 0
      %467 = vperm.xlu0 %466, %v433
      %v468 = vpop.permute.xlu0 %467
      %471 = vset.pattern.permute.xlu0 0
      %472 = vperm.xlu0 %471, %v434
      %v473 = vpop.permute.xlu0 %472
      %v475 = vmul.f32 %v389, %v438
      %v476 = vmul.f32 %v391, %v438
      %v477 = vmul.f32 %v393, %v443
      %v478 = vmul.f32 %v395, %v443
      %v479 = vmul.f32 %v399, %v448
      %v480 = vmul.f32 %v401, %v448
      %v481 = vmul.f32 %v403, %v453
      %v482 = vmul.f32 %v405, %v453
      %v483 = vmul.f32 %v409, %v458
      %v484 = vmul.f32 %v411, %v458
      %v485 = vmul.f32 %v413, %v463
      %v486 = vmul.f32 %v415, %v463
      %v487 = vmul.f32 %v419, %v468
      %v488 = vmul.f32 %v421, %v468
      %v489 = vmul.f32 %v423, %v473
      %v490 = vmul.f32 %v425, %v473
      %v491 = vld [vmem:[%s3] sm:$0xff]
      %v492 = vld [vmem:[%s3 + $0x8] sm:$0xff]
      %v493 = vld [vmem:[%s3 + $0x10] sm:$0xff]
      %v494 = vld [vmem:[%s3 + $0x18] sm:$0xff]
      %v495 = vld [vmem:[%s3 + $0x20] sm:$0xff]
      %v496 = vld [vmem:[%s3 + $0x28] sm:$0xff]
      %v497 = vld [vmem:[%s3 + $0x30] sm:$0xff]
      %v498 = vld [vmem:[%s3 + $0x38] sm:$0xff]
      %500 = vset.pattern.permute.xlu0 0
      %501 = vperm.xlu0 %500, %v491
      %v502 = vpop.permute.xlu0 %501
      %505 = vset.pattern.permute.xlu0 0
      %506 = vperm.xlu0 %505, %v492
      %v507 = vpop.permute.xlu0 %506
      %510 = vset.pattern.permute.xlu0 0
      %511 = vperm.xlu0 %510, %v493
      %v512 = vpop.permute.xlu0 %511
      %515 = vset.pattern.permute.xlu0 0
      %516 = vperm.xlu0 %515, %v494
      %v517 = vpop.permute.xlu0 %516
      %520 = vset.pattern.permute.xlu0 0
      %521 = vperm.xlu0 %520, %v495
      %v522 = vpop.permute.xlu0 %521
      %525 = vset.pattern.permute.xlu0 0
      %526 = vperm.xlu0 %525, %v496
      %v527 = vpop.permute.xlu0 %526
      %530 = vset.pattern.permute.xlu0 0
      %531 = vperm.xlu0 %530, %v497
      %v532 = vpop.permute.xlu0 %531
      %535 = vset.pattern.permute.xlu0 0
      %536 = vperm.xlu0 %535, %v498
      %v537 = vpop.permute.xlu0 %536
      %v539 = vadd.f32 %v475, %v502
      %v540 = vadd.f32 %v476, %v502
      %v541 = vadd.f32 %v477, %v507
      %v542 = vadd.f32 %v478, %v507
      %v543 = vadd.f32 %v479, %v512
      %v544 = vadd.f32 %v480, %v512
      %v545 = vadd.f32 %v481, %v517
      %v546 = vadd.f32 %v482, %v517
      %v547 = vadd.f32 %v483, %v522
      %v548 = vadd.f32 %v484, %v522
      %v549 = vadd.f32 %v485, %v527
      %v550 = vadd.f32 %v486, %v527
      %v551 = vadd.f32 %v487, %v532
      %v552 = vadd.f32 %v488, %v532
      %v553 = vadd.f32 %v489, %v537
      %v554 = vadd.f32 %v490, %v537
      %v555 = vmax.f32 %v539, 0.0
      %v556 = vmax.f32 %v540, 0.0
      %v557 = vmax.f32 %v541, 0.0
      %v558 = vmax.f32 %v542, 0.0
      %v559 = vmax.f32 %v543, 0.0
      %v560 = vmax.f32 %v544, 0.0
      %v561 = vmax.f32 %v545, 0.0
      %v562 = vmax.f32 %v546, 0.0
      %v563 = vmax.f32 %v547, 0.0
      %v564 = vmax.f32 %v548, 0.0
      %v565 = vmax.f32 %v549, 0.0
      %v566 = vmax.f32 %v550, 0.0
      %v567 = vmax.f32 %v551, 0.0
      %v568 = vmax.f32 %v552, 0.0
      %v569 = vmax.f32 %v553, 0.0
      %v570 = vmax.f32 %v554, 0.0
      %v571 = vpack.c.bf16 %v557, %v555
      %v572 = vpack.c.bf16 %v558, %v556
      %v573 = vpack.c.bf16 %v561, %v559
      %v574 = vpack.c.bf16 %v562, %v560
      %v575 = vpack.c.bf16 %v565, %v563
      %v576 = vpack.c.bf16 %v566, %v564
      %v577 = vpack.c.bf16 %v569, %v567
      %v578 = vpack.c.bf16 %v570, %v568
      %v587 = vunpack.c.l.b16 %v571
      %v588 = vunpack.c.l.b16 %v572
      %v589 = vunpack.c.h.b16 %v571
      %v590 = vunpack.c.h.b16 %v572
      %v591 = vunpack.c.l.b16 %v573
      %v592 = vunpack.c.l.b16 %v574
      %v593 = vunpack.c.h.b16 %v573
      %v594 = vunpack.c.h.b16 %v574
      %v595 = vunpack.c.l.b16 %v575
      %v596 = vunpack.c.l.b16 %v576
      %v597 = vunpack.c.h.b16 %v575
      %v598 = vunpack.c.h.b16 %v576
      %v599 = vunpack.c.l.b16 %v577
      %v600 = vunpack.c.l.b16 %v578
      %v601 = vunpack.c.h.b16 %v577
      %v602 = vunpack.c.h.b16 %v578
      %v603 = vpack.c.b16 %v588, %v587
      %v604 = vpack.c.b16 %v590, %v589
      %v605 = vpack.c.b16 %v592, %v591
      %v606 = vpack.c.b16 %v594, %v593
      %v607 = vpack.c.b16 %v596, %v595
      %v608 = vpack.c.b16 %v598, %v597
      %v609 = vpack.c.b16 %v600, %v599
      %v610 = vpack.c.b16 %v602, %v601
      %619 = vst [vmem:[%s276] sm:$0xff] %v603
      %620 = vst [vmem:[%s276 + $0x8] sm:$0xff] %v604
      %621 = vst [vmem:[%s276 + $0x10] sm:$0xff] %v605
      %622 = vst [vmem:[%s276 + $0x18] sm:$0xff] %v606
      %623 = vst [vmem:[%s276 + $0x20] sm:$0xff] %v607
      %624 = vst [vmem:[%s276 + $0x28] sm:$0xff] %v608
      %625 = vst [vmem:[%s276 + $0x30] sm:$0xff] %v609
      %626 = vst [vmem:[%s276 + $0x38] sm:$0xff] %v610
      %627 = vmatprep.subr.bf16.mxu0 %v572
      %628 = vmatpush1.bf16.xpose.msra.mxu0 %v571
      %629 = vmatprep.subr.bf16.mxu0 %v574
      %630 = vmatpush1.bf16.xpose.msra.mxu0 %v573
      %631 = vmatprep.subr.bf16.mxu0 %v576
      %632 = vmatpush1.bf16.xpose.msra.mxu0 %v575
      %633 = vmatprep.subr.bf16.mxu0 %v578
      %634 = vmatpush1.bf16.xpose.msra.mxu0 %v577
      %635 = vmatprep.subr.bf16.mxu0 1065369472
      %636 = vmatpush1.bf16.xpose.msra.mxu0 1065369472
      %637 = vmatprep.subr.bf16.mxu0 0
      %638 = vmatpush1.bf16.xpose.msra.mxu0 0
      %639 = vmatprep.subr.bf16.mxu0 0
      %640 = vmatpush1.bf16.xpose.msra.mxu0 0
      %641 = vmatprep.subr.bf16.mxu0 0
      %642 = vmatpush1.bf16.xpose.msra.mxu0 0
      %643 = vmatprep.subr.bf16.mxu0 0
      %644 = vmatpush1.bf16.xpose.msra.mxu0 0
      %645 = vmatprep.subr.bf16.mxu0 0
      %646 = vmatpush1.bf16.xpose.msra.mxu0 0
      %647 = vmatprep.subr.bf16.mxu0 0
      %648 = vmatpush1.bf16.xpose.msra.mxu0 0
      %649 = vmatprep.subr.bf16.mxu0 0
      %650 = vmatpush1.bf16.xpose.msra.mxu0 0
      %651 = vmatprep.subr.bf16.mxu0 0
      %652 = vmatpush1.bf16.xpose.msra.mxu0 0
      %653 = vmatprep.subr.bf16.mxu0 0
      %654 = vmatpush1.bf16.xpose.msra.mxu0 0
      %655 = vmatprep.subr.bf16.mxu0 0
      %656 = vmatpush1.bf16.xpose.msra.mxu0 0
      %657 = vmatprep.subr.bf16.mxu0 0
      %658 = vmatpush1.bf16.xpose.msra.mxu0 0
      %659 = vmatprep.mubr.bf16.mxu0 %v572
      %660 = vmatmul.mubr.bf16.gmra.mrb[0].mxu0 %v571
      %v661 = vpop.f32.mrb[0].mxu0
      %v662 = vadd.f32 0.0, %v661
      %v663 = vpop.f32.mrb[0].mxu0
      %v664 = vpop.f32.mrb[0].mxu0
      %v665 = vadd.f32 0.0, %v664
      %v666 = vpop.f32.mrb[0].mxu0
      %667 = vmatprep.mubr.bf16.mxu0 %v574
      %668 = vmatmul.mubr.bf16.gmra.mrb[0].mxu0 %v573
      %v669 = vpop.f32.mrb[0].mxu0
      %v670 = vadd.f32 0.0, %v669
      %v671 = vpop.f32.mrb[0].mxu0
      %v672 = vpop.f32.mrb[0].mxu0
      %v673 = vadd.f32 0.0, %v672
      %v674 = vpop.f32.mrb[0].mxu0
      %675 = vmatprep.mubr.bf16.mxu0 %v576
      %676 = vmatmul.mubr.bf16.gmra.mrb[0].mxu0 %v575
      %v677 = vpop.f32.mrb[0].mxu0
      %v678 = vadd.f32 0.0, %v677
      %v679 = vpop.f32.mrb[0].mxu0
      %v680 = vpop.f32.mrb[0].mxu0
      %v681 = vadd.f32 0.0, %v680
      %v682 = vpop.f32.mrb[0].mxu0
      %683 = vmatprep.mubr.bf16.mxu0 %v578
      %684 = vmatmul.mubr.bf16.gmra.mrb[0].mxu0 %v577
      %v685 = vpop.f32.mrb[0].mxu0
      %v686 = vadd.f32 0.0, %v685
      %v687 = vpop.f32.mrb[0].mxu0
      %v688 = vpop.f32.mrb[0].mxu0
      %v689 = vadd.f32 0.0, %v688
      %v690 = vpop.f32.mrb[0].mxu0
      %691 = vmatprep.mubr.bf16.mxu0 1065369472
      %692 = vmatmul.mubr.bf16.gmra.mrb[0].mxu0 1065369472
      %v693 = vpop.f32.mrb[0].mxu0
      %v694 = vadd.f32 0.0, %v693
      %v695 = vpop.f32.mrb[0].mxu0
      %v696 = vpop.f32.mrb[0].mxu0
      %v697 = vpop.f32.mrb[0].mxu0
      %698 = vdwg.mxu0
      %vm699 = vcmask 531456
      %700 = vst.msk [vmem:[%s286] sm:$0xff] %vm699, %v662
      %701 = vst.msk [vmem:[%s286 + $0x8] sm:$0xff] %vm699, %v665
      %702 = vst.msk [vmem:[%s286 + $0x10] sm:$0xff] %vm699, %v670
      %703 = vst.msk [vmem:[%s286 + $0x18] sm:$0xff] %vm699, %v673
      %704 = vst.msk [vmem:[%s286 + $0x20] sm:$0xff] %vm699, %v678
      %705 = vst.msk [vmem:[%s286 + $0x28] sm:$0xff] %vm699, %v681
      %706 = vst.msk [vmem:[%s286 + $0x30] sm:$0xff] %vm699, %v686
      %707 = vst.msk [vmem:[%s286 + $0x38] sm:$0xff] %vm699, %v689
      %vm708 = vcmask 524288
      %709 = vst.msk [vmem:[%s286 + $0x40] sm:$0x1] %vm708, %v694
      %s710 = smul.u32 2, %s22
      %p711 = scmp.lt.s32.totalorder %s21, 1
      %s712 = scalar_select %p711, %s21, 1
      %p713 = scmp.lt.s32.totalorder %s710, 1
      %s714 = scalar_select %p713, %s710, 1
      %s715 = smul.addr %s712, 16
      %s716 = sadd.s32 %s714, %s715
      %s717 = smul.addr %s716, 4
      %s718 = scalar_lea.vmem %s4, %s717
      %p719 = scmp.lt.s32.totalorder %s21, 1
      %s720 = scalar_select %p719, %s21, 1
      %p721 = scmp.lt.s32.totalorder %s22, 0
      %s722 = scalar_select %p721, %s22, 0
      %s723 = smul.addr %s722, 9
      %s724 = smul.addr %s720, 9
      %s725 = sadd.s32 %s723, %s724
      %s726 = smul.addr %s725, 8
      %s727 = scalar_lea.vmem %s5, %s726
      // Predicated region
      $region37: #{netg_mlp_v1_forward.7} parent=35 // pred_check
        %p728 = pneg %p140
      $region38: #{netg_mlp_v1_forward.7} parent=35 // pred_check_branch
        %730 = sbr.rel (%p728) target = $region40
      $region39: #{netg_mlp_v1_forward.7} parent=35 // pred_region
        %s731 = smul.u32 2, %s22
      $region40: #{netg_mlp_v1_forward.7} parent=35 // pred_fallthru
        _
      // Predicated region
      $region41: #{netg_mlp_v1_forward.7} parent=35 // pred_check
        %p732 = pneg %p168
      $region42: #{netg_mlp_v1_forward.7} parent=35 // pred_check_branch
        %734 = sbr.rel (%p732) target = $region44
      $region43: #{netg_mlp_v1_forward.7} parent=35 // pred_region
        _
      $region44: #{netg_mlp_v1_forward.7} parent=35 // pred_fallthru
        _
    $region36: #{netg_mlp_v1_forward.7} parent=5 // pred_fallthru
      _
    %p735 = scmp.le.s32.totalorder 2, %s12
    // Predicated region
    $region45: #{netg_mlp_v1_forward.7} parent=5 // pred_check
      %p736 = pneg %p735
    $region46: #{netg_mlp_v1_forward.7} parent=5 // pred_check_branch
      %738 = sbr.rel (%p736) target = $region48
    $region47: #{netg_mlp_v1_forward.7} parent=5 // pred_region
      %s739 = ssub.s32 %s12, 2
      // Predicated region
      $region49: #{netg_mlp_v1_forward.7} parent=47 // pred_check
        %p740 = pneg %p146
      $region50: #{netg_mlp_v1_forward.7} parent=47 // pred_check_branch
        %742 = sbr.rel (%p740) target = $region52
      $region51: #{netg_mlp_v1_forward.7} parent=47 // pred_region
        %s743 = smul.u32 2, %s24
        %p744 = scmp.lt.s32.totalorder %s23, 1
        %s745 = scalar_select %p744, %s23, 1
        %p746 = scmp.lt.s32.totalorder %s743, 1
        %s747 = scalar_select %p746, %s743, 1
        %s748 = smul.addr %s745, 16
        %s749 = sadd.s32 %s747, %s748
        %s750 = smul.addr %s749, 4
        %s751 = scalar_lea.vmem %s4, %s750
      $region52: #{netg_mlp_v1_forward.7} parent=47 // pred_fallthru
        _
      // Predicated region
      $region53: #{netg_mlp_v1_forward.7} parent=47 // pred_check
        %p752 = pneg %p174
      $region54: #{netg_mlp_v1_forward.7} parent=47 // pred_check_branch
        %754 = sbr.rel (%p752) target = $region56
      $region55: #{netg_mlp_v1_forward.7} parent=47 // pred_region
        %p755 = scmp.lt.s32.totalorder %s23, 1
        %s756 = scalar_select %p755, %s23, 1
        %p757 = scmp.lt.s32.totalorder %s24, 0
        %s758 = scalar_select %p757, %s24, 0
        %s759 = smul.addr %s758, 9
        %s760 = smul.addr %s756, 9
        %s761 = sadd.s32 %s759, %s760
        %s762 = smul.addr %s761, 8
        %s763 = scalar_lea.vmem %s5, %s762
      $region56: #{netg_mlp_v1_forward.7} parent=47 // pred_fallthru
        _
    $region48: #{netg_mlp_v1_forward.7} parent=5 // pred_fallthru
      _
  $region6: #{netg_mlp_v1_forward.7} parent=0 // loop_footer
    %s16 = sadd.s32 1, %s12
  $region7: #{netg_mlp_v1_forward.7} parent=0 // loop_footer_branch
    %11 = sbr.rel target = $region3
  $region8: #{netg_mlp_v1_forward.7} parent=0 // loop_exit
    _

// kernel: netg_mlp_v1_forward.9
$region0: #{netg_mlp_v1_forward.9}
  #allocation0 [shape = 'u32[]', space=smem, size = 0x4, offset = 0x4, fixed_abs, tag = 'smem constant byte address 0x4 - core index']
  #allocation1 [shape = 'u32[144,128]{1,0:T(1,128)}', space=vmem, size = 0x12000, scoped, tag = 'internal scratch']
  %s0 = inlined_call_operand.vmem [shape: bf16[2,32,256], index: 0, kind: input, shape index: {}]
  %s1 = inlined_call_operand.vmem [shape: bf16[3,32], index: 1, kind: input, shape index: {}]
  %s2 = inlined_call_operand.vmem [shape: f32[3,1], index: 2, kind: input, shape index: {}]
  %s3 = inlined_call_operand.vmem [shape: f32[3,1], index: 3, kind: input, shape index: {}]
  %s4 = inlined_call_operand.vmem [shape: f32[2,3,256], index: 4, kind: output, shape index: {}]
  %s5 = sld [smem:[#allocation0]]
  $region49: #{netg_mlp_v1_forward.9} parent=0
    _
  %s7 = ssub.s32 1, %s5
  %s8 = scalar_select 0, %s7, %s5
  loop: start=0, step=1, limit=4
  $region2: #{netg_mlp_v1_forward.9} parent=0 // loop_pre_header
    _
  $region3: #{netg_mlp_v1_forward.9} parent=0 // loop_header
    %s10 = sphi 0, %s14
    %p11 = scmp.ge.s32.totalorder %s10, 4
    %s17 = sphi 0, %s29
    %s18 = sphi 0, %s25
    %s19 = sphi 0, %s17
    %s20 = sphi 0, %s18
    %s21 = sphi 0, %s19
    %s22 = sphi 0, %s20
    %s34 = sphi 0, %s36
    %s37 = sphi 0, %s34
    %s38 = sphi 0, %s37
    %s54 = sphi 0, %s38
    %s58 = sphi 0, %s58
    %s60 = sphi 0, %s58
    %s61 = sphi 0, %s60
    %s75 = sphi 0, %s61
    %s79 = sphi 0, %s79
    %s81 = sphi 0, %s79
    %s82 = sphi 0, %s81
    %s96 = sphi 0, %s82
    %s100 = sphi 0, %s100
    %s102 = sphi 0, %s100
    %s103 = sphi 0, %s102
    %s117 = sphi 0, %s103
    %s125 = sphi 0, %s127
    %s128 = sphi 0, %s125
    %s129 = sphi 0, %s128
    %s145 = sphi 0, %s129
  $region4: #{netg_mlp_v1_forward.9} parent=0 // loop_header_branch
    %13 = sbr.rel (%p11) target = $region8
  $region5: #{netg_mlp_v1_forward.9} parent=0 // loop_body
    %s15 = ssub.s32 %s10, 1
    %s16 = ssub.s32 %s10, 2
    %s23 = sadd.s32 1, %s18
    %p24 = scmp.ge.s32.totalorder %s23, 1
    %s25 = scalar_select %p24, 0, %s23
    %s26 = sadd.s32 1, %s17
    %s27 = scalar_select %p24, %s26, %s17
    %p28 = scmp.ge.s32.totalorder %s27, 2
    %s29 = scalar_select %p28, 0, %s27
    %s30 = ssub.s32 %s17, %s29
    %s31 = ssub.s32 %s18, %s25
    %s32 = sor.u32 %s30, %s31
    %p33 = scmp.eq.s32.totalorder %s32, 0
    %s35 = sadd.s32 %s34, 1
    %s36 = scalar_select %p33, %s34, %s35
    %p39 = pneg %p33
    %p40 = scmp.eq.s32.totalorder %s10, 1
    %p41 = por %p39, %p40
    %p42 = scmp.ne.s32.totalorder %s34, %s37
    %p43 = scmp.eq.s32.totalorder %s10, 0
    %p44 = por %p42, %p43
    %p45 = scmp.ne.s32.totalorder %s34, %s37
    %p46 = scmp.eq.s32.totalorder %s15, 1
    %p47 = por %p45, %p46
    %p48 = scmp.ne.s32.totalorder %s37, %s38
    %p49 = scmp.eq.s32.totalorder %s15, 0
    %p50 = por %p48, %p49
    %p51 = scmp.ne.s32.totalorder %s37, %s38
    %p52 = scmp.eq.s32.totalorder %s16, 1
    %p53 = por %p51, %p52
    %p55 = scmp.ne.s32.totalorder %s38, %s54
    %p56 = scmp.eq.s32.totalorder %s16, 0
    %p57 = por %p55, %p56
    %s59 = sadd.s32 %s58, 1
    %p62 = scmp.eq.s32.totalorder %s10, 1
    %p63 = scmp.ne.s32.totalorder %s58, %s60
    %p64 = scmp.eq.s32.totalorder %s10, 0
    %p65 = por %p63, %p64
    %p66 = scmp.ne.s32.totalorder %s58, %s60
    %p67 = scmp.eq.s32.totalorder %s15, 1
    %p68 = por %p66, %p67
    %p69 = scmp.ne.s32.totalorder %s60, %s61
    %p70 = scmp.eq.s32.totalorder %s15, 0
    %p71 = por %p69, %p70
    %p72 = scmp.ne.s32.totalorder %s60, %s61
    %p73 = scmp.eq.s32.totalorder %s16, 1
    %p74 = por %p72, %p73
    %p76 = scmp.ne.s32.totalorder %s61, %s75
    %p77 = scmp.eq.s32.totalorder %s16, 0
    %p78 = por %p76, %p77
    %s80 = sadd.s32 %s79, 1
    %p83 = scmp.eq.s32.totalorder %s10, 1
    %p84 = scmp.ne.s32.totalorder %s79, %s81
    %p85 = scmp.eq.s32.totalorder %s10, 0
    %p86 = por %p84, %p85
    %p87 = scmp.ne.s32.totalorder %s79, %s81
    %p88 = scmp.eq.s32.totalorder %s15, 1
    %p89 = por %p87, %p88
    %p90 = scmp.ne.s32.totalorder %s81, %s82
    %p91 = scmp.eq.s32.totalorder %s15, 0
    %p92 = por %p90, %p91
    %p93 = scmp.ne.s32.totalorder %s81, %s82
    %p94 = scmp.eq.s32.totalorder %s16, 1
    %p95 = por %p93, %p94
    %p97 = scmp.ne.s32.totalorder %s82, %s96
    %p98 = scmp.eq.s32.totalorder %s16, 0
    %p99 = por %p97, %p98
    %s101 = sadd.s32 %s100, 1
    %p104 = scmp.eq.s32.totalorder %s10, 1
    %p105 = scmp.ne.s32.totalorder %s100, %s102
    %p106 = scmp.eq.s32.totalorder %s10, 0
    %p107 = por %p105, %p106
    %p108 = scmp.ne.s32.totalorder %s100, %s102
    %p109 = scmp.eq.s32.totalorder %s15, 1
    %p110 = por %p108, %p109
    %p111 = scmp.ne.s32.totalorder %s102, %s103
    %p112 = scmp.eq.s32.totalorder %s15, 0
    %p113 = por %p111, %p112
    %p114 = scmp.ne.s32.totalorder %s102, %s103
    %p115 = scmp.eq.s32.totalorder %s16, 1
    %p116 = por %p114, %p115
    %p118 = scmp.ne.s32.totalorder %s103, %s117
    %p119 = scmp.eq.s32.totalorder %s16, 0
    %p120 = por %p118, %p119
    %s121 = ssub.s32 %s17, %s29
    %s122 = ssub.s32 %s18, %s25
    %s123 = sor.u32 %s121, %s122
    %p124 = scmp.eq.s32.totalorder %s123, 0
    %s126 = sadd.s32 %s125, 1
    %s127 = scalar_select %p124, %s125, %s126
    %p130 = pneg %p124
    %p131 = scmp.eq.s32.totalorder %s10, 1
    %p132 = por %p130, %p131
    %p133 = scmp.ne.s32.totalorder %s125, %s128
    %p134 = scmp.eq.s32.totalorder %s10, 0
    %p135 = por %p133, %p134
    %p136 = scmp.ne.s32.totalorder %s125, %s128
    %p137 = scmp.eq.s32.totalorder %s15, 1
    %p138 = por %p136, %p137
    %p139 = scmp.ne.s32.totalorder %s128, %s129
    %p140 = scmp.eq.s32.totalorder %s15, 0
    %p141 = por %p139, %p140
    %p142 = scmp.ne.s32.totalorder %s128, %s129
    %p143 = scmp.eq.s32.totalorder %s16, 1
    %p144 = por %p142, %p143
    %p146 = scmp.ne.s32.totalorder %s129, %s145
    %p147 = scmp.eq.s32.totalorder %s16, 0
    %p148 = por %p146, %p147
    %p149 = scmp.le.s32.totalorder 1, %s10
    %p150 = scmp.lt.s32.totalorder %s10, 3
    %p151 = pnand %p149, %p150
    %p152 = pneg %p151
    // Predicated region
    $region9: #{netg_mlp_v1_forward.9} parent=5 // pred_check
      _
    $region10: #{netg_mlp_v1_forward.9} parent=5 // pred_check_branch
      %154 = sbr.rel (%p151) target = $region12
    $region11: #{netg_mlp_v1_forward.9} parent=5 // pred_region
      %s155 = ssub.s32 %s10, 1
      // Predicated region
      $region13: #{netg_mlp_v1_forward.9} parent=11 // pred_check
        %p156 = pneg %p71
      $region14: #{netg_mlp_v1_forward.9} parent=11 // pred_check_branch
        %158 = sbr.rel (%p156) target = $region16
      $region15: #{netg_mlp_v1_forward.9} parent=11 // pred_region
        _
      $region16: #{netg_mlp_v1_forward.9} parent=11 // pred_fallthru
        _
      // Predicated region
      $region17: #{netg_mlp_v1_forward.9} parent=11 // pred_check
        %p159 = pneg %p92
      $region18: #{netg_mlp_v1_forward.9} parent=11 // pred_check_branch
        %161 = sbr.rel (%p159) target = $region20
      $region19: #{netg_mlp_v1_forward.9} parent=11 // pred_region
        _
      $region20: #{netg_mlp_v1_forward.9} parent=11 // pred_fallthru
        _
      // Predicated region
      $region21: #{netg_mlp_v1_forward.9} parent=11 // pred_check
        %p162 = pneg %p113
      $region22: #{netg_mlp_v1_forward.9} parent=11 // pred_check_branch
        %164 = sbr.rel (%p162) target = $region24
      $region23: #{netg_mlp_v1_forward.9} parent=11 // pred_region
        _
      $region24: #{netg_mlp_v1_forward.9} parent=11 // pred_fallthru
        _
    $region12: #{netg_mlp_v1_forward.9} parent=5 // pred_fallthru
      _
    %p165 = scmp.lt.s32.totalorder %s10, 2
    // Predicated region
    $region25: #{netg_mlp_v1_forward.9} parent=5 // pred_check
      %p166 = pneg %p165
    $region26: #{netg_mlp_v1_forward.9} parent=5 // pred_check_branch
      %168 = sbr.rel (%p166) target = $region28
    $region27: #{netg_mlp_v1_forward.9} parent=5 // pred_region
      // Predicated region
      $region29: #{netg_mlp_v1_forward.9} parent=27 // pred_check
        %p169 = pneg %p44
      $region30: #{netg_mlp_v1_forward.9} parent=27 // pred_check_branch
        %171 = sbr.rel (%p169) target = $region32
      $region31: #{netg_mlp_v1_forward.9} parent=27 // pred_region
        %s172 = smul.u32 2, %s18
        %p173 = scmp.lt.s32.totalorder %s17, 1
        %s174 = scalar_select %p173, %s17, 1
        %p175 = scmp.lt.s32.totalorder %s172, 1
        %s176 = scalar_select %p175, %s172, 1
        %s177 = smul.addr %s174, 8
        %s178 = sadd.s32 %s176, %s177
        %s179 = smul.addr %s178, 4
        %s180 = scalar_lea.vmem %s0, %s179
        %s181 = smul.u32 2, %s18
      $region32: #{netg_mlp_v1_forward.9} parent=27 // pred_fallthru
        _
    $region28: #{netg_mlp_v1_forward.9} parent=5 // pred_fallthru
      _
    %p182 = scmp.le.s32.totalorder 1, %s10
    %p183 = scmp.lt.s32.totalorder %s10, 3
    %p184 = pnand %p182, %p183
    %p185 = pneg %p184
    // Predicated region
    $region33: #{netg_mlp_v1_forward.9} parent=5 // pred_check
      _
    $region34: #{netg_mlp_v1_forward.9} parent=5 // pred_check_branch
      %187 = sbr.rel (%p184) target = $region36
    $region35: #{netg_mlp_v1_forward.9} parent=5 // pred_region
      %s188 = ssub.s32 %s10, 1
      %s189 = smul.u32 2, %s20
      %p190 = scmp.lt.s32.totalorder %s19, 1
      %s191 = scalar_select %p190, %s19, 1
      %p192 = scmp.lt.s32.totalorder %s189, 1
      %s193 = scalar_select %p192, %s189, 1
      %s194 = smul.addr %s191, 8
      %s195 = sadd.s32 %s193, %s194
      %s196 = smul.addr %s195, 4
      %s197 = scalar_lea.vmem %s0, %s196
      %p198 = pneg %p50
      %p199 = pneg %p47
      %p200 = pneg %p71
      %p201 = pneg %p68
      %p202 = pneg %p92
      %p203 = pneg %p89
      %p204 = pneg %p113
      %p205 = pneg %p110
      %p206 = pneg %p141
      %p207 = pneg %p138
      %s208 = smul.u32 2, %s20
      %p209 = scmp.lt.s32.totalorder %s19, 1
      %s210 = scalar_select %p209, %s19, 1
      %p211 = scmp.lt.s32.totalorder %s208, 1
      %s212 = scalar_select %p211, %s208, 1
      %s213 = smul.addr %s210, 2
      %s214 = sadd.s32 %s212, %s213
      %s215 = smul.addr %s214, 4
      %s216 = scalar_lea.vmem %s4, %s215
      %s217 = smul.u32 2, %s20
      %p218 = scmp.lt.s32.totalorder %s19, 1
      %s219 = scalar_select %p218, %s19, 1
      %p220 = scmp.lt.s32.totalorder %s217, 1
      %s221 = scalar_select %p220, %s217, 1
      %s222 = smul.addr %s219, 8
      %s223 = sadd.s32 %s221, %s222
      %s224 = smul.addr %s223, 4
      %s225 = scalar_lea.vmem %s0, %s224
      %s226 = smul.u32 2, %s20
      %s227 = smul.u32 2, %s20
      %p228 = scmp.lt.s32.totalorder %s19, 1
      %s229 = scalar_select %p228, %s19, 1
      %p230 = scmp.lt.s32.totalorder %s227, 1
      %s231 = scalar_select %p230, %s227, 1
      %s232 = smul.addr %s229, 2
      %s233 = sadd.s32 %s231, %s232
      %s234 = smul.addr %s233, 4
      %s235 = scalar_lea.vmem %s4, %s234
      %s236 = smul.u32 2, %s20
      %v238 = vld [vmem:[%s225] sm:$0xff]
      %v239 = vld [vmem:[%s225 + $0x8] sm:$0xff]
      %v240 = vld [vmem:[%s225 + $0x10] sm:$0xff]
      %v241 = vld [vmem:[%s225 + $0x18] sm:$0xff]
      %v242 = vld [vmem:[%s1] sm:$0x3]
      %v247 = vunpack.c.l.b16 %v238
      %v248 = vunpack.c.h.b16 %v238
      %v249 = vunpack.c.l.b16 %v239
      %v250 = vunpack.c.h.b16 %v239
      %v251 = vunpack.c.l.b16 %v240
      %v252 = vunpack.c.h.b16 %v240
      %v253 = vunpack.c.l.b16 %v241
      %v254 = vunpack.c.h.b16 %v241
      %v255 = vpack.c.b16 %v249, %v247
      %v256 = vpack.c.b16 %v250, %v248
      %v257 = vpack.c.b16 %v253, %v251
      %v258 = vpack.c.b16 %v254, %v252
      %vm263 = vcmask 261120
      %v265 = vsel %vm263, %v242, 0
      %267 = vmatprep.subr.bf16.mxu0 %v256
      %268 = vmatpush1.bf16.msra.mxu0 %v255
      %269 = vmatprep.subr.bf16.mxu0 %v258
      %270 = vmatpush1.bf16.msra.mxu0 %v257
      %271 = vmatprep.subr.bf16.mxu0 0
      %272 = vmatpush1.bf16.msra.mxu0 0
      %273 = vmatprep.subr.bf16.mxu0 0
      %274 = vmatpush1.bf16.msra.mxu0 0
      %275 = vmatprep.subr.bf16.mxu0 0
      %276 = vmatpush1.bf16.msra.mxu0 0
      %277 = vmatprep.subr.bf16.mxu0 0
      %278 = vmatpush1.bf16.msra.mxu0 0
      %279 = vmatprep.subr.bf16.mxu0 0
      %280 = vmatpush1.bf16.msra.mxu0 0
      %281 = vmatprep.subr.bf16.mxu0 0
      %282 = vmatpush1.bf16.msra.mxu0 0
      %283 = vmatprep.subr.bf16.mxu0 0
      %284 = vmatpush1.bf16.msra.mxu0 0
      %285 = vmatprep.subr.bf16.mxu0 0
      %286 = vmatpush1.bf16.msra.mxu0 0
      %287 = vmatprep.subr.bf16.mxu0 0
      %288 = vmatpush1.bf16.msra.mxu0 0
      %289 = vmatprep.subr.bf16.mxu0 0
      %290 = vmatpush1.bf16.msra.mxu0 0
      %291 = vmatprep.subr.bf16.mxu0 0
      %292 = vmatpush1.bf16.msra.mxu0 0
      %293 = vmatprep.subr.bf16.mxu0 0
      %294 = vmatpush1.bf16.msra.mxu0 0
      %295 = vmatprep.subr.bf16.mxu0 0
      %296 = vmatpush1.bf16.msra.mxu0 0
      %297 = vmatprep.subr.bf16.mxu0 0
      %298 = vmatpush1.bf16.msra.mxu0 0
      %299 = vmatprep.mubr.bf16.mxu0 0
      %300 = vmatmul.mubr.bf16.gmra.mrb[0].mxu0 %v265
      %v301 = vpop.f32.mrb[0].mxu0
      %v302 = vadd.f32 0.0, %v301
      %v303 = vpop.f32.mrb[0].mxu0
      %v304 = vadd.f32 0.0, %v303
      %v305 = vpop.f32.mrb[0].mxu0
      %v306 = vpop.f32.mrb[0].mxu0
      %307 = vdwg.mxu0
      %v308 = vld [vmem:[%s2] sm:$0x7]
      %310 = vset.pattern.permute.xlu0 0
      %311 = vperm.xlu0 %310, %v308
      %v312 = vpop.permute.xlu0 %311
      %v314 = vmul.f32 %v302, %v312
      %v315 = vmul.f32 %v304, %v312
      %v316 = vld [vmem:[%s3] sm:$0x7]
      %318 = vset.pattern.permute.xlu0 0
      %319 = vperm.xlu0 %318, %v316
      %v320 = vpop.permute.xlu0 %319
      %v322 = vadd.f32 %v314, %v320
      %v323 = vadd.f32 %v315, %v320
      %v324 = vtanh.pop %v322
      %v325 = vtanh.pop %v323
      %v328 = vcombine.low %v324, %v325
      %330 = vst [vmem:[%s235] sm:$0x77] %v328
      %s331 = smul.u32 2, %s20
      %p332 = scmp.lt.s32.totalorder %s19, 1
      %s333 = scalar_select %p332, %s19, 1
      %p334 = scmp.lt.s32.totalorder %s331, 1
      %s335 = scalar_select %p334, %s331, 1
      %s336 = smul.addr %s333, 2
      %s337 = sadd.s32 %s335, %s336
      %s338 = smul.addr %s337, 4
      %s339 = scalar_lea.vmem %s4, %s338
      // Predicated region
      $region37: #{netg_mlp_v1_forward.9} parent=35 // pred_check
        %p340 = pneg %p138
      $region38: #{netg_mlp_v1_forward.9} parent=35 // pred_check_branch
        %342 = sbr.rel (%p340) target = $region40
      $region39: #{netg_mlp_v1_forward.9} parent=35 // pred_region
        %s343 = smul.u32 2, %s20
      $region40: #{netg_mlp_v1_forward.9} parent=35 // pred_fallthru
        _
    $region36: #{netg_mlp_v1_forward.9} parent=5 // pred_fallthru
      _
    %p344 = scmp.le.s32.totalorder 2, %s10
    // Predicated region
    $region41: #{netg_mlp_v1_forward.9} parent=5 // pred_check
      %p345 = pneg %p344
    $region42: #{netg_mlp_v1_forward.9} parent=5 // pred_check_branch
      %347 = sbr.rel (%p345) target = $region44
    $region43: #{netg_mlp_v1_forward.9} parent=5 // pred_region
      %s348 = ssub.s32 %s10, 2
      // Predicated region
      $region45: #{netg_mlp_v1_forward.9} parent=43 // pred_check
        %p349 = pneg %p144
      $region46: #{netg_mlp_v1_forward.9} parent=43 // pred_check_branch
        %351 = sbr.rel (%p349) target = $region48
      $region47: #{netg_mlp_v1_forward.9} parent=43 // pred_region
        %s352 = smul.u32 2, %s22
        %p353 = scmp.lt.s32.totalorder %s21, 1
        %s354 = scalar_select %p353, %s21, 1
        %p355 = scmp.lt.s32.totalorder %s352, 1
        %s356 = scalar_select %p355, %s352, 1
        %s357 = smul.addr %s354, 2
        %s358 = sadd.s32 %s356, %s357
        %s359 = smul.addr %s358, 4
        %s360 = scalar_lea.vmem %s4, %s359
      $region48: #{netg_mlp_v1_forward.9} parent=43 // pred_fallthru
        _
    $region44: #{netg_mlp_v1_forward.9} parent=5 // pred_fallthru
      _
  $region6: #{netg_mlp_v1_forward.9} parent=0 // loop_footer
    %s14 = sadd.s32 1, %s10
  $region7: #{netg_mlp_v1_forward.9} parent=0 // loop_footer_branch
    %9 = sbr.rel target = $region3
  $region8: #{netg_mlp_v1_forward.9} parent=0 // loop_exit
    _

</llo_original>
